<compile_context>
chip_gen: v7x
topology: tpu7x:2x2x1
jax: 0.10.0
libtpu: 0.0.40
codegen_flags: <defaults>
</compile_context>

<pallas_src>
import jax
import jax.numpy as jnp
from jax.experimental import pallas as pl
from jax.experimental.pallas import tpu as pltpu

IN_FEATURES = 28 * 28   # 784
HIDDEN = 128


def _round_up(n, m):
    return ((n + m - 1) // m) * m


def _discriminator_kernel(x_ref, w1_ref, b1_ref, w2_ref, b2_ref, o_ref):
    # x_ref:  (TILE_B, 784)  bf16   -- streamed batch tile
    # w1_ref: (784, 128)     bf16   -- resident
    # b1_ref: (1, 128)       f32    -- resident
    # w2_ref: (1, 128)       f32    -- resident (dense2 weight row)
    # b2_ref: (1, 1)         f32    -- resident
    # o_ref:  (1, 1, TILE_B) f32    -- lane-dense output (batch on lane axis)

    # dense1 + ReLU: bf16 MXU matmul with f32 accumulation.
    h = jnp.dot(x_ref[...], w1_ref[...], preferred_element_type=jnp.float32)
    h = jnp.maximum(h + b1_ref[...], 0.0)                               # (TILE_B, 128)

    # dense2 (out_features == 1): lane-wise multiply + XLU lane reduce.
    logit = jnp.sum(h * w2_ref[...], axis=-1)[None, :] + b2_ref[...]     # (1, TILE_B)

    # sigmoid: exp on EUP, approximate reciprocal also on EUP.
    sig = pl.reciprocal(1.0 + jnp.exp(-logit), approx=True)              # (1, TILE_B)
    o_ref[...] = sig[None]                                               # (1, 1, TILE_B)


def prepare_params(w1, b1, w2, b2):
    """One-time conversion from torch layout (w1 (128,784), b1 (128,), w2 (1,128),
    b2 (1,)) to kernel layout. Do NOT call this per forward pass."""
    w1_t = jnp.asarray(w1, jnp.float32).T.astype(jnp.bfloat16)   # (784, 128) bf16
    b1_r = jnp.asarray(b1, jnp.float32).reshape(1, HIDDEN)       # (1, 128)   f32
    w2_r = jnp.asarray(w2, jnp.float32).reshape(1, HIDDEN)       # (1, 128)   f32
    b2_r = jnp.asarray(b2, jnp.float32).reshape(1, 1)            # (1, 1)     f32
    return w1_t, b1_r, w2_r, b2_r


def mnist_discriminator_forward(x_nchw, params, *, tile_b=1024):
    """x_nchw: (B, 1, 28, 28), params from prepare_params(). Returns (B, 1) f32."""
    w1_t, b1_r, w2_r, b2_r = params
    B = x_nchw.shape[0]
    # Same semantics as torch's .view(B, -1): row-major flatten. bf16 for the MXU.
    x2d = x_nchw.reshape(B, IN_FEATURES).astype(jnp.bfloat16)

    # Batch tiling: single sublane-aligned tile for small B, otherwise fixed
    # 128-aligned tiles with a zero-padded tail.
    if B <= tile_b:
        tile = _round_up(max(B, 1), 8)
    else:
        tile = _round_up(tile_b, 128)
    b_pad = _round_up(B, tile)
    if b_pad != B:
        x2d = jnp.pad(x2d, ((0, b_pad - B), (0, 0)))
    num_tiles = b_pad // tile

    grid_spec = pltpu.PrefetchScalarGridSpec(
        num_scalar_prefetch=0,
        grid=(num_tiles,),
        in_specs=[
            pl.BlockSpec((tile, IN_FEATURES), lambda i: (i, 0)),    # x: streamed
            pl.BlockSpec((IN_FEATURES, HIDDEN), lambda i: (0, 0)),  # w1: resident
            pl.BlockSpec((1, HIDDEN), lambda i: (0, 0)),            # b1: resident
            pl.BlockSpec((1, HIDDEN), lambda i: (0, 0)),            # w2: resident
            pl.BlockSpec((1, 1), lambda i: (0, 0)),                 # b2: resident
        ],
        out_specs=pl.BlockSpec((1, 1, tile), lambda i: (i, 0, 0)),  # lane-dense
    )

    out = pl.pallas_call(
        _discriminator_kernel,
        out_shape=jax.ShapeDtypeStruct((num_tiles, 1, tile), jnp.float32),
        grid_spec=grid_spec,
        compiler_params=pltpu.CompilerParams(
            dimension_semantics=("parallel",),   # shards steps across TCs on v7x
        ),
    )(x2d, w1_t, b1_r, w2_r, b2_r)

    # (num_tiles, 1, tile) flattens row-major into batch order; drop padded rows.
    return out.reshape(b_pad)[:B].reshape(B, 1)


def _init_params(key):
    """Deterministic init matching the torch layer shapes
    (nn.Linear default: U(-1/sqrt(fan_in), 1/sqrt(fan_in)))."""
    k1, k2, k3, k4 = jax.random.split(key, 4)
    bound1 = 1.0 / jnp.sqrt(784.0)
    bound2 = 1.0 / jnp.sqrt(128.0)
    w1 = jax.random.uniform(k1, (HIDDEN, IN_FEATURES), jnp.float32, -bound1, bound1)
    b1 = jax.random.uniform(k2, (HIDDEN,), jnp.float32, -bound1, bound1)
    w2 = jax.random.uniform(k3, (1, HIDDEN), jnp.float32, -bound2, bound2)
    b2 = jax.random.uniform(k4, (1,), jnp.float32, -bound2, bound2)
    return w1, b1, w2, b2


if __name__ == "__main__":
    key = jax.random.PRNGKey(0)
    k_x, k_p = jax.random.split(key)

    # Small demo batch that is NOT a multiple of the tile -> exercises the
    # multi-tile grid path and the padded-tail handling.
    B = 200
    x = jax.random.normal(k_x, (B, 1, 28, 28), jnp.float32)
    w1, b1, w2, b2 = _init_params(k_p)
    params = prepare_params(w1, b1, w2, b2)

    out = mnist_discriminator_forward(x, params, tile_b=128)   # 2 grid steps
    out = jax.block_until_ready(out)

    # Pure-JAX reference with the same bf16 MXU inputs / f32 accumulation.
    x2d = x.reshape(B, -1)
    ref_h = jnp.maximum(
        jnp.dot(x2d.astype(jnp.bfloat16), w1.T.astype(jnp.bfloat16),
                preferred_element_type=jnp.float32) + b1[None, :],
        0.0,
    )
    ref = jax.nn.sigmoid(ref_h @ w2.T + b2)

    assert out.shape == (B, 1)
    max_err = float(jnp.max(jnp.abs(out - ref)))
    assert jnp.allclose(out, ref, atol=5e-3, rtol=0.0), f"max abs err {max_err}"

    print("KERNEL_OK")
</pallas_src>

<mosaic_0001>
module attributes {stable_mosaic.version = 11 : i64} {
  func.func @_discriminator_kernel(%arg0: i32, %arg1: memref<128x784xbf16, #tpu.memory_space<vmem>>, %arg2: memref<784x128xbf16, #tpu.memory_space<vmem>>, %arg3: memref<1x128xf32, #tpu.memory_space<vmem>>, %arg4: memref<1x128xf32, #tpu.memory_space<vmem>>, %arg5: memref<1x1xf32, #tpu.memory_space<vmem>>, %arg6: memref<1x1x128xf32, #tpu.memory_space<vmem>>) attributes {dimension_semantics = [#tpu.dimension_semantics<parallel>], iteration_bounds = array<i64: 2>, scalar_prefetch = 0 : i64, scratch_operands = 0 : i64, tpu.core_type = #tpu.core_type<tc>, window_params = [{transform_indices = @transform_0, window_bounds = array<i64: 128, 784>}, {pipeline_mode = #tpu.pipeline_mode<synchronous>, transform_indices = @transform_1, window_bounds = array<i64: 784, 128>}, {pipeline_mode = #tpu.pipeline_mode<synchronous>, transform_indices = @transform_2, window_bounds = array<i64: 1, 128>}, {pipeline_mode = #tpu.pipeline_mode<synchronous>, transform_indices = @transform_3, window_bounds = array<i64: 1, 128>}, {pipeline_mode = #tpu.pipeline_mode<synchronous>, transform_indices = @transform_4, window_bounds = array<i64: 1, 1>}, {transform_indices = @transform_5, window_bounds = array<i64: 1, 1, 128>}]} {
    %c0 = arith.constant 0 : index
    %c0_0 = arith.constant 0 : index
    %0 = vector.load %arg1[%c0, %c0_0] : memref<128x784xbf16, #tpu.memory_space<vmem>>, vector<128x784xbf16>
    %c0_1 = arith.constant 0 : index
    %c0_2 = arith.constant 0 : index
    %1 = vector.load %arg2[%c0_1, %c0_2] : memref<784x128xbf16, #tpu.memory_space<vmem>>, vector<784x128xbf16>
    %cst = arith.constant dense<0.000000e+00> : vector<128x128xf32>
    %2 = tpu.matmul %0, %1, %cst {dimension_numbers = #tpu.dot_dimension_numbers<[1], [0], [0], [1], [0, 0, 1, 1], [], []>} : vector<128x784xbf16>, vector<784x128xbf16>, vector<128x128xf32> -> vector<128x128xf32>
    %c0_3 = arith.constant 0 : index
    %c0_4 = arith.constant 0 : index
    %3 = vector.load %arg3[%c0_3, %c0_4] : memref<1x128xf32, #tpu.memory_space<vmem>>, vector<1x128xf32>
    %4 = vector.broadcast %3 : vector<1x128xf32> to vector<128x128xf32>
    %5 = arith.addf %2, %4 : vector<128x128xf32>
    %cst_5 = arith.constant 0.000000e+00 : f32
    %6 = vector.broadcast %cst_5 : f32 to vector<128x128xf32>
    %7 = arith.maximumf %5, %6 : vector<128x128xf32>
    %c0_6 = arith.constant 0 : index
    %c0_7 = arith.constant 0 : index
    %8 = vector.load %arg4[%c0_6, %c0_7] : memref<1x128xf32, #tpu.memory_space<vmem>>, vector<1x128xf32>
    %9 = vector.broadcast %8 : vector<1x128xf32> to vector<128x128xf32>
    %10 = arith.mulf %7, %9 : vector<128x128xf32>
    %cst_8 = arith.constant dense<0.000000e+00> : vector<128xf32>
    %11 = vector.multi_reduction <add>, %10, %cst_8 [1] : vector<128x128xf32> to vector<128xf32>
    %12 = vector.shape_cast %11 : vector<128xf32> to vector<1x128xf32>
    %c0_9 = arith.constant 0 : index
    %c0_10 = arith.constant 0 : index
    %13 = vector.load %arg5[%c0_9, %c0_10] : memref<1x1xf32, #tpu.memory_space<vmem>>, vector<1x1xf32>
    %14 = vector.broadcast %13 : vector<1x1xf32> to vector<1x128xf32>
    %15 = arith.addf %12, %14 : vector<1x128xf32>
    %cst_11 = arith.constant 0.000000e+00 : f32
    %16 = vector.broadcast %cst_11 : f32 to vector<1x128xf32>
    %17 = arith.subf %16, %15 : vector<1x128xf32>
    %18 = math.exp %17 : vector<1x128xf32>
    %cst_12 = arith.constant 1.000000e+00 : f32
    %19 = vector.broadcast %cst_12 : f32 to vector<1x128xf32>
    %20 = arith.addf %19, %18 : vector<1x128xf32>
    %21 = tpu.reciprocal %20 {approx = true} : vector<1x128xf32> -> vector<1x128xf32>
    %22 = vector.shape_cast %21 : vector<1x128xf32> to vector<1x1x128xf32>
    %c0_13 = arith.constant 0 : index
    %c0_14 = arith.constant 0 : index
    %c0_15 = arith.constant 0 : index
    %23 = vector.load %arg6[%c0_13, %c0_14, %c0_15] : memref<1x1x128xf32, #tpu.memory_space<vmem>>, vector<1x1x128xf32>
    tpu.vector_store %arg6[%c0_13, %c0_14, %c0_15], %22 {strides = array<i32>} : memref<1x1x128xf32, #tpu.memory_space<vmem>>, vector<1x1x128xf32>,
    return
  }
  func.func @transform_0(%arg0: i32) -> (i32, i32) {
    %c0_i32 = arith.constant 0 : i32
    %c0_i32_0 = arith.constant 0 : i32
    return %arg0, %c0_i32 : i32, i32
  }
  func.func @transform_1(%arg0: i32) -> (i32, i32) {
    %c0_i32 = arith.constant 0 : i32
    %c0_i32_0 = arith.constant 0 : i32
    %c0_i32_1 = arith.constant 0 : i32
    return %c0_i32, %c0_i32_0 : i32, i32
  }
  func.func @transform_2(%arg0: i32) -> (i32, i32) {
    %c0_i32 = arith.constant 0 : i32
    %c0_i32_0 = arith.constant 0 : i32
    %c0_i32_1 = arith.constant 0 : i32
    return %c0_i32, %c0_i32_0 : i32, i32
  }
  func.func @transform_3(%arg0: i32) -> (i32, i32) {
    %c0_i32 = arith.constant 0 : i32
    %c0_i32_0 = arith.constant 0 : i32
    %c0_i32_1 = arith.constant 0 : i32
    return %c0_i32, %c0_i32_0 : i32, i32
  }
  func.func @transform_4(%arg0: i32) -> (i32, i32) {
    %c0_i32 = arith.constant 0 : i32
    %c0_i32_0 = arith.constant 0 : i32
    %c0_i32_1 = arith.constant 0 : i32
    return %c0_i32, %c0_i32_0 : i32, i32
  }
  func.func @transform_5(%arg0: i32) -> (i32, i32, i32) {
    %c0_i32 = arith.constant 0 : i32
    %c0_i32_0 = arith.constant 0 : i32
    %c0_i32_1 = arith.constant 0 : i32
    return %arg0, %c0_i32, %c0_i32_0 : i32, i32, i32
  }
}

</mosaic_0001>

<llo_original>
// kernel: tpu_custom_call.1
$region0: #{tpu_custom_call.1}
  #allocation0 [shape = 'u32[]', space=smem, size = 0x4, offset = 0x4, fixed_abs, tag = 'smem constant byte address 0x4 - core index']
  #allocation1 [shape = 'u32[144,128]{1,0:T(1,128)}', space=vmem, size = 0x12000, scoped, tag = 'internal scratch']
  #allocation2 [shape = 'f32[1,1]{1,0:T(1,128)S(1)}', space=vmem, size = 0x200, scoped, tag = 'scoped memory for tpu_custom_call.1']
  %s0 = inlined_call_operand.vmem [shape: bf16[256,784], index: 0, kind: input, shape index: {}]
  %s1 = inlined_call_operand.vmem [shape: bf16[784,128], index: 1, kind: input, shape index: {}]
  %s2 = inlined_call_operand.vmem [shape: f32[1,128], index: 2, kind: input, shape index: {}]
  %s3 = inlined_call_operand.vmem [shape: f32[1,128], index: 3, kind: input, shape index: {}]
  %s4 = inlined_call_operand.<no memory space> [shape: f32[1,1], index: 4, kind: input, shape index: {}]
  %s5 = inlined_call_operand.hbm [shape: f32[2,1,128], index: 5, kind: output, shape index: {}]
  %s6 = sld [smem:[#allocation0]]
  $region53: #{tpu_custom_call.1} parent=0
    _
  %s8 = ssub.s32 1, %s6
  %s9 = scalar_select 0, %s8, %s6
  %v10 = vstv %s4
  %11 = vst [vmem:[#allocation2] sm:$0x1] %v10
  $region1: #{tpu_custom_call.1} parent=0
    #allocation3 [shape = 'u8[1024]{0}', space=vmem, size = 0x400, scoped, tag = 'output window, operand 0']
    #allocation4 [shape = 's32[2]{0}', space=sflag, size = 0x8, scoped, tag = 'scoped memory for tpu_custom_call.1']
    %12 = vsyncpa [#allocation4], 0
    %s13 = scalar_lea.sflag [#allocation4], 1
    %14 = vsyncpa %s13, 0
    loop: start=0, step=1, limit=4
    $region2: #{tpu_custom_call.1} parent=1 // loop_pre_header
      _
    $region3: #{tpu_custom_call.1} parent=1 // loop_header
      %s16 = sphi 0, %s20
      %p17 = scmp.ge.s32.totalorder %s16, 4
      %s26 = sphi 0, %s28
      %s29 = sphi 0, %s26
      %s30 = sphi 0, %s29
      %s46 = sphi 0, %s30
      %s50 = sphi 0, %s50
      %s52 = sphi 0, %s50
      %s53 = sphi 0, %s52
      %s67 = sphi 0, %s53
      %s71 = sphi 0, %s71
      %s73 = sphi 0, %s71
      %s74 = sphi 0, %s73
      %s88 = sphi 0, %s74
      %s92 = sphi 0, %s92
      %s94 = sphi 0, %s92
      %s95 = sphi 0, %s94
      %s109 = sphi 0, %s95
      %s113 = sphi 0, %s113
      %s115 = sphi 0, %s113
      %s116 = sphi 0, %s115
      %s130 = sphi 0, %s116
      %s136 = sphi 0, %s138
      %s139 = sphi 0, %s136
      %s140 = sphi 0, %s139
      %s156 = sphi 0, %s140
    $region4: #{tpu_custom_call.1} parent=1 // loop_header_branch
      %19 = sbr.rel (%p17) target = $region8
    $region5: #{tpu_custom_call.1} parent=1 // loop_body
      %s21 = ssub.s32 %s16, 1
      %s22 = ssub.s32 %s16, 2
      %s23 = sadd.s32 %s16, 1
      %s24 = ssub.s32 %s16, %s23
      %p25 = scmp.eq.s32.totalorder %s24, 0
      %s27 = sadd.s32 %s26, 1
      %s28 = scalar_select %p25, %s26, %s27
      %p31 = pneg %p25
      %p32 = scmp.eq.s32.totalorder %s16, 1
      %p33 = por %p31, %p32
      %p34 = scmp.ne.s32.totalorder %s26, %s29
      %p35 = scmp.eq.s32.totalorder %s16, 0
      %p36 = por %p34, %p35
      %p37 = scmp.ne.s32.totalorder %s26, %s29
      %p38 = scmp.eq.s32.totalorder %s21, 1
      %p39 = por %p37, %p38
      %p40 = scmp.ne.s32.totalorder %s29, %s30
      %p41 = scmp.eq.s32.totalorder %s21, 0
      %p42 = por %p40, %p41
      %p43 = scmp.ne.s32.totalorder %s29, %s30
      %p44 = scmp.eq.s32.totalorder %s22, 1
      %p45 = por %p43, %p44
      %p47 = scmp.ne.s32.totalorder %s30, %s46
      %p48 = scmp.eq.s32.totalorder %s22, 0
      %p49 = por %p47, %p48
      %s51 = sadd.s32 %s50, 1
      %p54 = scmp.eq.s32.totalorder %s16, 1
      %p55 = scmp.ne.s32.totalorder %s50, %s52
      %p56 = scmp.eq.s32.totalorder %s16, 0
      %p57 = por %p55, %p56
      %p58 = scmp.ne.s32.totalorder %s50, %s52
      %p59 = scmp.eq.s32.totalorder %s21, 1
      %p60 = por %p58, %p59
      %p61 = scmp.ne.s32.totalorder %s52, %s53
      %p62 = scmp.eq.s32.totalorder %s21, 0
      %p63 = por %p61, %p62
      %p64 = scmp.ne.s32.totalorder %s52, %s53
      %p65 = scmp.eq.s32.totalorder %s22, 1
      %p66 = por %p64, %p65
      %p68 = scmp.ne.s32.totalorder %s53, %s67
      %p69 = scmp.eq.s32.totalorder %s22, 0
      %p70 = por %p68, %p69
      %s72 = sadd.s32 %s71, 1
      %p75 = scmp.eq.s32.totalorder %s16, 1
      %p76 = scmp.ne.s32.totalorder %s71, %s73
      %p77 = scmp.eq.s32.totalorder %s16, 0
      %p78 = por %p76, %p77
      %p79 = scmp.ne.s32.totalorder %s71, %s73
      %p80 = scmp.eq.s32.totalorder %s21, 1
      %p81 = por %p79, %p80
      %p82 = scmp.ne.s32.totalorder %s73, %s74
      %p83 = scmp.eq.s32.totalorder %s21, 0
      %p84 = por %p82, %p83
      %p85 = scmp.ne.s32.totalorder %s73, %s74
      %p86 = scmp.eq.s32.totalorder %s22, 1
      %p87 = por %p85, %p86
      %p89 = scmp.ne.s32.totalorder %s74, %s88
      %p90 = scmp.eq.s32.totalorder %s22, 0
      %p91 = por %p89, %p90
      %s93 = sadd.s32 %s92, 1
      %p96 = scmp.eq.s32.totalorder %s16, 1
      %p97 = scmp.ne.s32.totalorder %s92, %s94
      %p98 = scmp.eq.s32.totalorder %s16, 0
      %p99 = por %p97, %p98
      %p100 = scmp.ne.s32.totalorder %s92, %s94
      %p101 = scmp.eq.s32.totalorder %s21, 1
      %p102 = por %p100, %p101
      %p103 = scmp.ne.s32.totalorder %s94, %s95
      %p104 = scmp.eq.s32.totalorder %s21, 0
      %p105 = por %p103, %p104
      %p106 = scmp.ne.s32.totalorder %s94, %s95
      %p107 = scmp.eq.s32.totalorder %s22, 1
      %p108 = por %p106, %p107
      %p110 = scmp.ne.s32.totalorder %s95, %s109
      %p111 = scmp.eq.s32.totalorder %s22, 0
      %p112 = por %p110, %p111
      %s114 = sadd.s32 %s113, 1
      %p117 = scmp.eq.s32.totalorder %s16, 1
      %p118 = scmp.ne.s32.totalorder %s113, %s115
      %p119 = scmp.eq.s32.totalorder %s16, 0
      %p120 = por %p118, %p119
      %p121 = scmp.ne.s32.totalorder %s113, %s115
      %p122 = scmp.eq.s32.totalorder %s21, 1
      %p123 = por %p121, %p122
      %p124 = scmp.ne.s32.totalorder %s115, %s116
      %p125 = scmp.eq.s32.totalorder %s21, 0
      %p126 = por %p124, %p125
      %p127 = scmp.ne.s32.totalorder %s115, %s116
      %p128 = scmp.eq.s32.totalorder %s22, 1
      %p129 = por %p127, %p128
      %p131 = scmp.ne.s32.totalorder %s116, %s130
      %p132 = scmp.eq.s32.totalorder %s22, 0
      %p133 = por %p131, %p132
      %s134 = ssub.s32 %s16, %s23
      %p135 = scmp.eq.s32.totalorder %s134, 0
      %s137 = sadd.s32 %s136, 1
      %s138 = scalar_select %p135, %s136, %s137
      %p141 = pneg %p135
      %p142 = scmp.eq.s32.totalorder %s16, 1
      %p143 = por %p141, %p142
      %p144 = scmp.ne.s32.totalorder %s136, %s139
      %p145 = scmp.eq.s32.totalorder %s16, 0
      %p146 = por %p144, %p145
      %p147 = scmp.ne.s32.totalorder %s136, %s139
      %p148 = scmp.eq.s32.totalorder %s21, 1
      %p149 = por %p147, %p148
      %p150 = scmp.ne.s32.totalorder %s139, %s140
      %p151 = scmp.eq.s32.totalorder %s21, 0
      %p152 = por %p150, %p151
      %p153 = scmp.ne.s32.totalorder %s139, %s140
      %p154 = scmp.eq.s32.totalorder %s22, 1
      %p155 = por %p153, %p154
      %p157 = scmp.ne.s32.totalorder %s140, %s156
      %p158 = scmp.eq.s32.totalorder %s22, 0
      %p159 = por %p157, %p158
      %p160 = scmp.le.s32.totalorder 1, %s16
      %p161 = scmp.lt.s32.totalorder %s16, 3
      %p162 = pnand %p160, %p161
      %p163 = pneg %p162
      // Predicated region
      $region9: #{tpu_custom_call.1} parent=5 // pred_check
        _
      $region10: #{tpu_custom_call.1} parent=5 // pred_check_branch
        %165 = sbr.rel (%p162) target = $region12
      $region11: #{tpu_custom_call.1} parent=5 // pred_region
        %s166 = ssub.s32 %s16, 1
        // Predicated region
        $region13: #{tpu_custom_call.1} parent=11 // pred_check
          %p167 = pneg %p63
        $region14: #{tpu_custom_call.1} parent=11 // pred_check_branch
          %169 = sbr.rel (%p167) target = $region16
        $region15: #{tpu_custom_call.1} parent=11 // pred_region
          _
        $region16: #{tpu_custom_call.1} parent=11 // pred_fallthru
          _
        // Predicated region
        $region17: #{tpu_custom_call.1} parent=11 // pred_check
          %p170 = pneg %p84
        $region18: #{tpu_custom_call.1} parent=11 // pred_check_branch
          %172 = sbr.rel (%p170) target = $region20
        $region19: #{tpu_custom_call.1} parent=11 // pred_region
          _
        $region20: #{tpu_custom_call.1} parent=11 // pred_fallthru
          _
        // Predicated region
        $region21: #{tpu_custom_call.1} parent=11 // pred_check
          %p173 = pneg %p105
        $region22: #{tpu_custom_call.1} parent=11 // pred_check_branch
          %175 = sbr.rel (%p173) target = $region24
        $region23: #{tpu_custom_call.1} parent=11 // pred_region
          _
        $region24: #{tpu_custom_call.1} parent=11 // pred_fallthru
          _
        // Predicated region
        $region25: #{tpu_custom_call.1} parent=11 // pred_check
          %p176 = pneg %p126
        $region26: #{tpu_custom_call.1} parent=11 // pred_check_branch
          %178 = sbr.rel (%p176) target = $region28
        $region27: #{tpu_custom_call.1} parent=11 // pred_region
          _
        $region28: #{tpu_custom_call.1} parent=11 // pred_fallthru
          _
      $region12: #{tpu_custom_call.1} parent=5 // pred_fallthru
        _
      %p179 = scmp.lt.s32.totalorder %s16, 2
      // Predicated region
      $region29: #{tpu_custom_call.1} parent=5 // pred_check
        %p180 = pneg %p179
      $region30: #{tpu_custom_call.1} parent=5 // pred_check_branch
        %182 = sbr.rel (%p180) target = $region32
      $region31: #{tpu_custom_call.1} parent=5 // pred_region
        // Predicated region
        $region33: #{tpu_custom_call.1} parent=31 // pred_check
          %p183 = pneg %p36
        $region34: #{tpu_custom_call.1} parent=31 // pred_check_branch
          %185 = sbr.rel (%p183) target = $region36
        $region35: #{tpu_custom_call.1} parent=31 // pred_region
          %s186 = smul.u32 16, %s16
          %p187 = scmp.lt.s32.totalorder %s186, 31
          %s188 = scalar_select %p187, %s186, 31
          %s189 = smul.addr %s188, 7
          %s190 = smul.addr %s189, 4
          %s191 = scalar_lea.vmem %s0, %s190
          %s192 = smul.u32 16, %s16
        $region36: #{tpu_custom_call.1} parent=31 // pred_fallthru
          _
      $region32: #{tpu_custom_call.1} parent=5 // pred_fallthru
        _
      %p193 = scmp.le.s32.totalorder 1, %s16
      %p194 = scmp.lt.s32.totalorder %s16, 3
      %p195 = pnand %p193, %p194
      %p196 = pneg %p195
      // Predicated region
      $region37: #{tpu_custom_call.1} parent=5 // pred_check
        _
      $region38: #{tpu_custom_call.1} parent=5 // pred_check_branch
        %198 = sbr.rel (%p195) target = $region40
      $region39: #{tpu_custom_call.1} parent=5 // pred_region
        %s199 = ssub.s32 %s16, 1
        %s200 = smul.u32 16, %s21
        %p201 = scmp.lt.s32.totalorder %s200, 31
        %s202 = scalar_select %p201, %s200, 31
        %s203 = smul.addr %s202, 7
        %s204 = smul.addr %s203, 4
        %s205 = scalar_lea.vmem %s0, %s204
        %p206 = pneg %p42
        %p207 = pneg %p39
        %p208 = pneg %p63
        %p209 = pneg %p60
        %p210 = pneg %p84
        %p211 = pneg %p81
        %p212 = pneg %p105
        %p213 = pneg %p102
        %p214 = pneg %p126
        %p215 = pneg %p123
        %p216 = pneg %p152
        %p217 = pneg %p149
        %s218 = sand.u32 %s139, 1
        %s219 = scalar_lea.sflag [#allocation4], %s218
        %s220 = sand.u32 %s139, 1
        %s221 = scalar_lea.vmem [#allocation3], %s220
        %s222 = smul.u32 16, %s21
        %p223 = scmp.lt.s32.totalorder %s222, 31
        %s224 = scalar_select %p223, %s222, 31
        %s225 = smul.addr %s224, 7
        %s226 = smul.addr %s225, 4
        %s227 = scalar_lea.vmem %s0, %s226
        %s228 = smul.u32 16, %s21
        %v230 = vld [vmem:[%s227] sm:$0xff]
        %v231 = vld [vmem:[%s227 + $0x8] sm:$0xff]
        %v232 = vld [vmem:[%s227 + $0x10] sm:$0xff]
        %v233 = vld [vmem:[%s227 + $0x18] sm:$0xf]
        %v234 = vld [vmem:[%s227 + $0x1c] sm:$0xff]
        %v235 = vld [vmem:[%s227 + $0x24] sm:$0xff]
        %v236 = vld [vmem:[%s227 + $0x2c] sm:$0xff]
        %v237 = vld [vmem:[%s227 + $0x34] sm:$0xf]
        %v238 = vld [vmem:[%s227 + $0x38] sm:$0xff]
        %v239 = vld [vmem:[%s227 + $0x40] sm:$0xff]
        %v240 = vld [vmem:[%s227 + $0x48] sm:$0xff]
        %v241 = vld [vmem:[%s227 + $0x50] sm:$0xf]
        %v242 = vld [vmem:[%s227 + $0x54] sm:$0xff]
        %v243 = vld [vmem:[%s227 + $0x5c] sm:$0xff]
        %v244 = vld [vmem:[%s227 + $0x64] sm:$0xff]
        %v245 = vld [vmem:[%s227 + $0x6c] sm:$0xf]
        %v246 = vld [vmem:[%s227 + $0x70] sm:$0xff]
        %v247 = vld [vmem:[%s227 + $0x78] sm:$0xff]
        %v248 = vld [vmem:[%s227 + $0x80] sm:$0xff]
        %v249 = vld [vmem:[%s227 + $0x88] sm:$0xf]
        %v250 = vld [vmem:[%s227 + $0x8c] sm:$0xff]
        %v251 = vld [vmem:[%s227 + $0x94] sm:$0xff]
        %v252 = vld [vmem:[%s227 + $0x9c] sm:$0xff]
        %v253 = vld [vmem:[%s227 + $0xa4] sm:$0xf]
        %v254 = vld [vmem:[%s227 + $0xa8] sm:$0xff]
        %v255 = vld [vmem:[%s227 + $0xb0] sm:$0xff]
        %v256 = vld [vmem:[%s227 + $0xb8] sm:$0xff]
        %v257 = vld [vmem:[%s227 + $0xc0] sm:$0xf]
        %v258 = vld [vmem:[%s227 + $0xc4] sm:$0xff]
        %v259 = vld [vmem:[%s227 + $0xcc] sm:$0xff]
        %v260 = vld [vmem:[%s227 + $0xd4] sm:$0xff]
        %v261 = vld [vmem:[%s227 + $0xdc] sm:$0xf]
        %v262 = vld [vmem:[%s227 + $0xe0] sm:$0xff]
        %v263 = vld [vmem:[%s227 + $0xe8] sm:$0xff]
        %v264 = vld [vmem:[%s227 + $0xf0] sm:$0xff]
        %v265 = vld [vmem:[%s227 + $0xf8] sm:$0xf]
        %v266 = vld [vmem:[%s227 + $0xfc] sm:$0xff]
        %v267 = vld [vmem:[%s227 + $0x104] sm:$0xff]
        %v268 = vld [vmem:[%s227 + $0x10c] sm:$0xff]
        %v269 = vld [vmem:[%s227 + $0x114] sm:$0xf]
        %v270 = vld [vmem:[%s227 + $0x118] sm:$0xff]
        %v271 = vld [vmem:[%s227 + $0x120] sm:$0xff]
        %v272 = vld [vmem:[%s227 + $0x128] sm:$0xff]
        %v273 = vld [vmem:[%s227 + $0x130] sm:$0xf]
        %v274 = vld [vmem:[%s227 + $0x134] sm:$0xff]
        %v275 = vld [vmem:[%s227 + $0x13c] sm:$0xff]
        %v276 = vld [vmem:[%s227 + $0x144] sm:$0xff]
        %v277 = vld [vmem:[%s227 + $0x14c] sm:$0xf]
        %v278 = vld [vmem:[%s227 + $0x150] sm:$0xff]
        %v279 = vld [vmem:[%s227 + $0x158] sm:$0xff]
        %v280 = vld [vmem:[%s227 + $0x160] sm:$0xff]
        %v281 = vld [vmem:[%s227 + $0x168] sm:$0xf]
        %v282 = vld [vmem:[%s227 + $0x16c] sm:$0xff]
        %v283 = vld [vmem:[%s227 + $0x174] sm:$0xff]
        %v284 = vld [vmem:[%s227 + $0x17c] sm:$0xff]
        %v285 = vld [vmem:[%s227 + $0x184] sm:$0xf]
        %v286 = vld [vmem:[%s227 + $0x188] sm:$0xff]
        %v287 = vld [vmem:[%s227 + $0x190] sm:$0xff]
        %v288 = vld [vmem:[%s227 + $0x198] sm:$0xff]
        %v289 = vld [vmem:[%s227 + $0x1a0] sm:$0xf]
        %v290 = vld [vmem:[%s227 + $0x1a4] sm:$0xff]
        %v291 = vld [vmem:[%s227 + $0x1ac] sm:$0xff]
        %v292 = vld [vmem:[%s227 + $0x1b4] sm:$0xff]
        %v293 = vld [vmem:[%s227 + $0x1bc] sm:$0xf]
        %v294 = vld [vmem:[%s1] sm:$0xf]
        %v295 = vld [vmem:[%s1 + $0x4] sm:$0xf]
        %v296 = vld [vmem:[%s1 + $0x8] sm:$0xf]
        %v297 = vld [vmem:[%s1 + $0xc] sm:$0xf]
        %v298 = vld [vmem:[%s1 + $0x10] sm:$0xf]
        %v299 = vld [vmem:[%s1 + $0x14] sm:$0xf]
        %v300 = vld [vmem:[%s1 + $0x18] sm:$0xf]
        %v301 = vld [vmem:[%s1 + $0x1c] sm:$0xf]
        %v302 = vld [vmem:[%s1 + $0x20] sm:$0xf]
        %v303 = vld [vmem:[%s1 + $0x24] sm:$0xf]
        %v304 = vld [vmem:[%s1 + $0x28] sm:$0xf]
        %v305 = vld [vmem:[%s1 + $0x2c] sm:$0xf]
        %v306 = vld [vmem:[%s1 + $0x30] sm:$0xf]
        %v307 = vld [vmem:[%s1 + $0x34] sm:$0xf]
        %v308 = vld [vmem:[%s1 + $0x38] sm:$0xf]
        %v309 = vld [vmem:[%s1 + $0x3c] sm:$0xf]
        %v310 = vld [vmem:[%s1 + $0x40] sm:$0xf]
        %v311 = vld [vmem:[%s1 + $0x44] sm:$0xf]
        %v312 = vld [vmem:[%s1 + $0x48] sm:$0xf]
        %v313 = vld [vmem:[%s1 + $0x4c] sm:$0xf]
        %v314 = vld [vmem:[%s1 + $0x50] sm:$0xf]
        %v315 = vld [vmem:[%s1 + $0x54] sm:$0xf]
        %v316 = vld [vmem:[%s1 + $0x58] sm:$0xf]
        %v317 = vld [vmem:[%s1 + $0x5c] sm:$0xf]
        %v318 = vld [vmem:[%s1 + $0x60] sm:$0xf]
        %v319 = vld [vmem:[%s1 + $0x64] sm:$0xf]
        %v320 = vld [vmem:[%s1 + $0x68] sm:$0xf]
        %v321 = vld [vmem:[%s1 + $0x6c] sm:$0xf]
        %v322 = vld [vmem:[%s1 + $0x70] sm:$0xf]
        %v323 = vld [vmem:[%s1 + $0x74] sm:$0xf]
        %v324 = vld [vmem:[%s1 + $0x78] sm:$0xf]
        %v325 = vld [vmem:[%s1 + $0x7c] sm:$0xf]
        %v326 = vld [vmem:[%s1 + $0x80] sm:$0xf]
        %v327 = vld [vmem:[%s1 + $0x84] sm:$0xf]
        %v328 = vld [vmem:[%s1 + $0x88] sm:$0xf]
        %v329 = vld [vmem:[%s1 + $0x8c] sm:$0xf]
        %v330 = vld [vmem:[%s1 + $0x90] sm:$0xf]
        %v331 = vld [vmem:[%s1 + $0x94] sm:$0xf]
        %v332 = vld [vmem:[%s1 + $0x98] sm:$0xf]
        %v333 = vld [vmem:[%s1 + $0x9c] sm:$0xf]
        %v334 = vld [vmem:[%s1 + $0xa0] sm:$0xf]
        %v335 = vld [vmem:[%s1 + $0xa4] sm:$0xf]
        %v336 = vld [vmem:[%s1 + $0xa8] sm:$0xf]
        %v337 = vld [vmem:[%s1 + $0xac] sm:$0xf]
        %v338 = vld [vmem:[%s1 + $0xb0] sm:$0xf]
        %v339 = vld [vmem:[%s1 + $0xb4] sm:$0xf]
        %v340 = vld [vmem:[%s1 + $0xb8] sm:$0xf]
        %v341 = vld [vmem:[%s1 + $0xbc] sm:$0xf]
        %v342 = vld [vmem:[%s1 + $0xc0] sm:$0xf]
        %v343 = vld [vmem:[%s1 + $0xc4] sm:$0xf]
        %v344 = vld [vmem:[%s1 + $0xc8] sm:$0xf]
        %v345 = vld [vmem:[%s1 + $0xcc] sm:$0xf]
        %v346 = vld [vmem:[%s1 + $0xd0] sm:$0xf]
        %v347 = vld [vmem:[%s1 + $0xd4] sm:$0xf]
        %v348 = vld [vmem:[%s1 + $0xd8] sm:$0xf]
        %v349 = vld [vmem:[%s1 + $0xdc] sm:$0xf]
        %v350 = vld [vmem:[%s1 + $0xe0] sm:$0xf]
        %v351 = vld [vmem:[%s1 + $0xe4] sm:$0xf]
        %v352 = vld [vmem:[%s1 + $0xe8] sm:$0xf]
        %v353 = vld [vmem:[%s1 + $0xec] sm:$0xf]
        %v354 = vld [vmem:[%s1 + $0xf0] sm:$0xf]
        %v355 = vld [vmem:[%s1 + $0xf4] sm:$0xf]
        %v356 = vld [vmem:[%s1 + $0xf8] sm:$0xf]
        %v357 = vld [vmem:[%s1 + $0xfc] sm:$0xf]
        %v358 = vld [vmem:[%s1 + $0x100] sm:$0xf]
        %v359 = vld [vmem:[%s1 + $0x104] sm:$0xf]
        %v360 = vld [vmem:[%s1 + $0x108] sm:$0xf]
        %v361 = vld [vmem:[%s1 + $0x10c] sm:$0xf]
        %v362 = vld [vmem:[%s1 + $0x110] sm:$0xf]
        %v363 = vld [vmem:[%s1 + $0x114] sm:$0xf]
        %v364 = vld [vmem:[%s1 + $0x118] sm:$0xf]
        %v365 = vld [vmem:[%s1 + $0x11c] sm:$0xf]
        %v366 = vld [vmem:[%s1 + $0x120] sm:$0xf]
        %v367 = vld [vmem:[%s1 + $0x124] sm:$0xf]
        %v368 = vld [vmem:[%s1 + $0x128] sm:$0xf]
        %v369 = vld [vmem:[%s1 + $0x12c] sm:$0xf]
        %v370 = vld [vmem:[%s1 + $0x130] sm:$0xf]
        %v371 = vld [vmem:[%s1 + $0x134] sm:$0xf]
        %v372 = vld [vmem:[%s1 + $0x138] sm:$0xf]
        %v373 = vld [vmem:[%s1 + $0x13c] sm:$0xf]
        %v374 = vld [vmem:[%s1 + $0x140] sm:$0xf]
        %v375 = vld [vmem:[%s1 + $0x144] sm:$0xf]
        %v376 = vld [vmem:[%s1 + $0x148] sm:$0xf]
        %v377 = vld [vmem:[%s1 + $0x14c] sm:$0xf]
        %v378 = vld [vmem:[%s1 + $0x150] sm:$0xf]
        %v379 = vld [vmem:[%s1 + $0x154] sm:$0xf]
        %v380 = vld [vmem:[%s1 + $0x158] sm:$0xf]
        %v381 = vld [vmem:[%s1 + $0x15c] sm:$0xf]
        %v382 = vld [vmem:[%s1 + $0x160] sm:$0xf]
        %v383 = vld [vmem:[%s1 + $0x164] sm:$0xf]
        %v384 = vld [vmem:[%s1 + $0x168] sm:$0xf]
        %v385 = vld [vmem:[%s1 + $0x16c] sm:$0xf]
        %v386 = vld [vmem:[%s1 + $0x170] sm:$0xf]
        %v387 = vld [vmem:[%s1 + $0x174] sm:$0xf]
        %v388 = vld [vmem:[%s1 + $0x178] sm:$0xf]
        %v389 = vld [vmem:[%s1 + $0x17c] sm:$0xf]
        %v390 = vld [vmem:[%s1 + $0x180] sm:$0xf]
        %v391 = vld [vmem:[%s1 + $0x184] sm:$0xf]
        %v392 = vld [vmem:[%s2] sm:$0x1]
        %v394 = vlaneseq
        %v395 = vshrl.u32 %v394, 7
        %v396 = vsub.s32 0, %v395
        %v397 = vrot.slane %v392, %v396
        %v463 = vunpack.c.l.b16 %v230
        %v464 = vunpack.c.h.b16 %v230
        %v465 = vunpack.c.l.b16 %v231
        %v466 = vunpack.c.h.b16 %v231
        %v467 = vunpack.c.l.b16 %v232
        %v468 = vunpack.c.h.b16 %v232
        %v469 = vunpack.c.l.b16 %v233
        %v470 = vunpack.c.l.b16 %v234
        %v471 = vunpack.c.h.b16 %v234
        %v472 = vunpack.c.l.b16 %v235
        %v473 = vunpack.c.h.b16 %v235
        %v474 = vunpack.c.l.b16 %v236
        %v475 = vunpack.c.h.b16 %v236
        %v476 = vunpack.c.l.b16 %v237
        %v477 = vunpack.c.l.b16 %v238
        %v478 = vunpack.c.h.b16 %v238
        %v479 = vunpack.c.l.b16 %v239
        %v480 = vunpack.c.h.b16 %v239
        %v481 = vunpack.c.l.b16 %v240
        %v482 = vunpack.c.h.b16 %v240
        %v483 = vunpack.c.l.b16 %v241
        %v484 = vunpack.c.l.b16 %v242
        %v485 = vunpack.c.h.b16 %v242
        %v486 = vunpack.c.l.b16 %v243
        %v487 = vunpack.c.h.b16 %v243
        %v488 = vunpack.c.l.b16 %v244
        %v489 = vunpack.c.h.b16 %v244
        %v490 = vunpack.c.l.b16 %v245
        %v491 = vunpack.c.l.b16 %v246
        %v492 = vunpack.c.h.b16 %v246
        %v493 = vunpack.c.l.b16 %v247
        %v494 = vunpack.c.h.b16 %v247
        %v495 = vunpack.c.l.b16 %v248
        %v496 = vunpack.c.h.b16 %v248
        %v497 = vunpack.c.l.b16 %v249
        %v498 = vunpack.c.l.b16 %v250
        %v499 = vunpack.c.h.b16 %v250
        %v500 = vunpack.c.l.b16 %v251
        %v501 = vunpack.c.h.b16 %v251
        %v502 = vunpack.c.l.b16 %v252
        %v503 = vunpack.c.h.b16 %v252
        %v504 = vunpack.c.l.b16 %v253
        %v505 = vunpack.c.l.b16 %v254
        %v506 = vunpack.c.h.b16 %v254
        %v507 = vunpack.c.l.b16 %v255
        %v508 = vunpack.c.h.b16 %v255
        %v509 = vunpack.c.l.b16 %v256
        %v510 = vunpack.c.h.b16 %v256
        %v511 = vunpack.c.l.b16 %v257
        %v512 = vunpack.c.l.b16 %v258
        %v513 = vunpack.c.h.b16 %v258
        %v514 = vunpack.c.l.b16 %v259
        %v515 = vunpack.c.h.b16 %v259
        %v516 = vunpack.c.l.b16 %v260
        %v517 = vunpack.c.h.b16 %v260
        %v518 = vunpack.c.l.b16 %v261
        %v519 = vunpack.c.l.b16 %v262
        %v520 = vunpack.c.h.b16 %v262
        %v521 = vunpack.c.l.b16 %v263
        %v522 = vunpack.c.h.b16 %v263
        %v523 = vunpack.c.l.b16 %v264
        %v524 = vunpack.c.h.b16 %v264
        %v525 = vunpack.c.l.b16 %v265
        %v526 = vunpack.c.l.b16 %v266
        %v527 = vunpack.c.h.b16 %v266
        %v528 = vunpack.c.l.b16 %v267
        %v529 = vunpack.c.h.b16 %v267
        %v530 = vunpack.c.l.b16 %v268
        %v531 = vunpack.c.h.b16 %v268
        %v532 = vunpack.c.l.b16 %v269
        %v533 = vunpack.c.l.b16 %v270
        %v534 = vunpack.c.h.b16 %v270
        %v535 = vunpack.c.l.b16 %v271
        %v536 = vunpack.c.h.b16 %v271
        %v537 = vunpack.c.l.b16 %v272
        %v538 = vunpack.c.h.b16 %v272
        %v539 = vunpack.c.l.b16 %v273
        %v540 = vunpack.c.l.b16 %v274
        %v541 = vunpack.c.h.b16 %v274
        %v542 = vunpack.c.l.b16 %v275
        %v543 = vunpack.c.h.b16 %v275
        %v544 = vunpack.c.l.b16 %v276
        %v545 = vunpack.c.h.b16 %v276
        %v546 = vunpack.c.l.b16 %v277
        %v547 = vunpack.c.l.b16 %v278
        %v548 = vunpack.c.h.b16 %v278
        %v549 = vunpack.c.l.b16 %v279
        %v550 = vunpack.c.h.b16 %v279
        %v551 = vunpack.c.l.b16 %v280
        %v552 = vunpack.c.h.b16 %v280
        %v553 = vunpack.c.l.b16 %v281
        %v554 = vunpack.c.l.b16 %v282
        %v555 = vunpack.c.h.b16 %v282
        %v556 = vunpack.c.l.b16 %v283
        %v557 = vunpack.c.h.b16 %v283
        %v558 = vunpack.c.l.b16 %v284
        %v559 = vunpack.c.h.b16 %v284
        %v560 = vunpack.c.l.b16 %v285
        %v561 = vunpack.c.l.b16 %v286
        %v562 = vunpack.c.h.b16 %v286
        %v563 = vunpack.c.l.b16 %v287
        %v564 = vunpack.c.h.b16 %v287
        %v565 = vunpack.c.l.b16 %v288
        %v566 = vunpack.c.h.b16 %v288
        %v567 = vunpack.c.l.b16 %v289
        %v568 = vunpack.c.l.b16 %v290
        %v569 = vunpack.c.h.b16 %v290
        %v570 = vunpack.c.l.b16 %v291
        %v571 = vunpack.c.h.b16 %v291
        %v572 = vunpack.c.l.b16 %v292
        %v573 = vunpack.c.h.b16 %v292
        %v574 = vunpack.c.l.b16 %v293
        %v575 = vpack.c.b16 %v470, %v463
        %v576 = vpack.c.b16 %v471, %v464
        %v577 = vpack.c.b16 %v472, %v465
        %v578 = vpack.c.b16 %v473, %v466
        %v579 = vpack.c.b16 %v474, %v467
        %v580 = vpack.c.b16 %v475, %v468
        %v581 = vpack.c.b16 %v476, %v469
        %v582 = vpack.c.b16 %v484, %v477
        %v583 = vpack.c.b16 %v485, %v478
        %v584 = vpack.c.b16 %v486, %v479
        %v585 = vpack.c.b16 %v487, %v480
        %v586 = vpack.c.b16 %v488, %v481
        %v587 = vpack.c.b16 %v489, %v482
        %v588 = vpack.c.b16 %v490, %v483
        %v589 = vpack.c.b16 %v498, %v491
        %v590 = vpack.c.b16 %v499, %v492
        %v591 = vpack.c.b16 %v500, %v493
        %v592 = vpack.c.b16 %v501, %v494
        %v593 = vpack.c.b16 %v502, %v495
        %v594 = vpack.c.b16 %v503, %v496
        %v595 = vpack.c.b16 %v504, %v497
        %v596 = vpack.c.b16 %v512, %v505
        %v597 = vpack.c.b16 %v513, %v506
        %v598 = vpack.c.b16 %v514, %v507
        %v599 = vpack.c.b16 %v515, %v508
        %v600 = vpack.c.b16 %v516, %v509
        %v601 = vpack.c.b16 %v517, %v510
        %v602 = vpack.c.b16 %v518, %v511
        %v603 = vpack.c.b16 %v526, %v519
        %v604 = vpack.c.b16 %v527, %v520
        %v605 = vpack.c.b16 %v528, %v521
        %v606 = vpack.c.b16 %v529, %v522
        %v607 = vpack.c.b16 %v530, %v523
        %v608 = vpack.c.b16 %v531, %v524
        %v609 = vpack.c.b16 %v532, %v525
        %v610 = vpack.c.b16 %v540, %v533
        %v611 = vpack.c.b16 %v541, %v534
        %v612 = vpack.c.b16 %v542, %v535
        %v613 = vpack.c.b16 %v543, %v536
        %v614 = vpack.c.b16 %v544, %v537
        %v615 = vpack.c.b16 %v545, %v538
        %v616 = vpack.c.b16 %v546, %v539
        %v617 = vpack.c.b16 %v554, %v547
        %v618 = vpack.c.b16 %v555, %v548
        %v619 = vpack.c.b16 %v556, %v549
        %v620 = vpack.c.b16 %v557, %v550
        %v621 = vpack.c.b16 %v558, %v551
        %v622 = vpack.c.b16 %v559, %v552
        %v623 = vpack.c.b16 %v560, %v553
        %v624 = vpack.c.b16 %v568, %v561
        %v625 = vpack.c.b16 %v569, %v562
        %v626 = vpack.c.b16 %v570, %v563
        %v627 = vpack.c.b16 %v571, %v564
        %v628 = vpack.c.b16 %v572, %v565
        %v629 = vpack.c.b16 %v573, %v566
        %v630 = vpack.c.b16 %v574, %v567
        %v777 = vunpack.c.l.b16 %v294
        %v778 = vunpack.c.l.b16 %v295
        %v779 = vunpack.c.l.b16 %v296
        %v780 = vunpack.c.l.b16 %v297
        %v781 = vunpack.c.l.b16 %v298
        %v782 = vunpack.c.l.b16 %v299
        %v783 = vunpack.c.l.b16 %v300
        %v784 = vunpack.c.l.b16 %v301
        %v785 = vunpack.c.l.b16 %v302
        %v786 = vunpack.c.l.b16 %v303
        %v787 = vunpack.c.l.b16 %v304
        %v788 = vunpack.c.l.b16 %v305
        %v789 = vunpack.c.l.b16 %v306
        %v790 = vunpack.c.l.b16 %v307
        %v791 = vunpack.c.l.b16 %v308
        %v792 = vunpack.c.l.b16 %v309
        %v793 = vunpack.c.l.b16 %v310
        %v794 = vunpack.c.l.b16 %v311
        %v795 = vunpack.c.l.b16 %v312
        %v796 = vunpack.c.l.b16 %v313
        %v797 = vunpack.c.l.b16 %v314
        %v798 = vunpack.c.l.b16 %v315
        %v799 = vunpack.c.l.b16 %v316
        %v800 = vunpack.c.l.b16 %v317
        %v801 = vunpack.c.l.b16 %v318
        %v802 = vunpack.c.l.b16 %v319
        %v803 = vunpack.c.l.b16 %v320
        %v804 = vunpack.c.l.b16 %v321
        %v805 = vunpack.c.l.b16 %v322
        %v806 = vunpack.c.l.b16 %v323
        %v807 = vunpack.c.l.b16 %v324
        %v808 = vunpack.c.l.b16 %v325
        %v809 = vunpack.c.l.b16 %v326
        %v810 = vunpack.c.l.b16 %v327
        %v811 = vunpack.c.l.b16 %v328
        %v812 = vunpack.c.l.b16 %v329
        %v813 = vunpack.c.l.b16 %v330
        %v814 = vunpack.c.l.b16 %v331
        %v815 = vunpack.c.l.b16 %v332
        %v816 = vunpack.c.l.b16 %v333
        %v817 = vunpack.c.l.b16 %v334
        %v818 = vunpack.c.l.b16 %v335
        %v819 = vunpack.c.l.b16 %v336
        %v820 = vunpack.c.l.b16 %v337
        %v821 = vunpack.c.l.b16 %v338
        %v822 = vunpack.c.l.b16 %v339
        %v823 = vunpack.c.l.b16 %v340
        %v824 = vunpack.c.l.b16 %v341
        %v825 = vunpack.c.l.b16 %v342
        %v826 = vunpack.c.l.b16 %v343
        %v827 = vunpack.c.l.b16 %v344
        %v828 = vunpack.c.l.b16 %v345
        %v829 = vunpack.c.l.b16 %v346
        %v830 = vunpack.c.l.b16 %v347
        %v831 = vunpack.c.l.b16 %v348
        %v832 = vunpack.c.l.b16 %v349
        %v833 = vunpack.c.l.b16 %v350
        %v834 = vunpack.c.l.b16 %v351
        %v835 = vunpack.c.l.b16 %v352
        %v836 = vunpack.c.l.b16 %v353
        %v837 = vunpack.c.l.b16 %v354
        %v838 = vunpack.c.l.b16 %v355
        %v839 = vunpack.c.l.b16 %v356
        %v840 = vunpack.c.l.b16 %v357
        %v841 = vunpack.c.l.b16 %v358
        %v842 = vunpack.c.l.b16 %v359
        %v843 = vunpack.c.l.b16 %v360
        %v844 = vunpack.c.l.b16 %v361
        %v845 = vunpack.c.l.b16 %v362
        %v846 = vunpack.c.l.b16 %v363
        %v847 = vunpack.c.l.b16 %v364
        %v848 = vunpack.c.l.b16 %v365
        %v849 = vunpack.c.l.b16 %v366
        %v850 = vunpack.c.l.b16 %v367
        %v851 = vunpack.c.l.b16 %v368
        %v852 = vunpack.c.l.b16 %v369
        %v853 = vunpack.c.l.b16 %v370
        %v854 = vunpack.c.l.b16 %v371
        %v855 = vunpack.c.l.b16 %v372
        %v856 = vunpack.c.l.b16 %v373
        %v857 = vunpack.c.l.b16 %v374
        %v858 = vunpack.c.l.b16 %v375
        %v859 = vunpack.c.l.b16 %v376
        %v860 = vunpack.c.l.b16 %v377
        %v861 = vunpack.c.l.b16 %v378
        %v862 = vunpack.c.l.b16 %v379
        %v863 = vunpack.c.l.b16 %v380
        %v864 = vunpack.c.l.b16 %v381
        %v865 = vunpack.c.l.b16 %v382
        %v866 = vunpack.c.l.b16 %v383
        %v867 = vunpack.c.l.b16 %v384
        %v868 = vunpack.c.l.b16 %v385
        %v869 = vunpack.c.l.b16 %v386
        %v870 = vunpack.c.l.b16 %v387
        %v871 = vunpack.c.l.b16 %v388
        %v872 = vunpack.c.l.b16 %v389
        %v873 = vunpack.c.l.b16 %v390
        %v874 = vunpack.c.l.b16 %v391
        %v875 = vpack.c.b16 %v778, %v777
        %v876 = vpack.c.b16 %v780, %v779
        %v877 = vpack.c.b16 %v782, %v781
        %v878 = vpack.c.b16 %v784, %v783
        %v879 = vpack.c.b16 %v786, %v785
        %v880 = vpack.c.b16 %v788, %v787
        %v881 = vpack.c.b16 %v790, %v789
        %v882 = vpack.c.b16 %v792, %v791
        %v883 = vpack.c.b16 %v794, %v793
        %v884 = vpack.c.b16 %v796, %v795
        %v885 = vpack.c.b16 %v798, %v797
        %v886 = vpack.c.b16 %v800, %v799
        %v887 = vpack.c.b16 %v802, %v801
        %v888 = vpack.c.b16 %v804, %v803
        %v889 = vpack.c.b16 %v806, %v805
        %v890 = vpack.c.b16 %v808, %v807
        %v891 = vpack.c.b16 %v810, %v809
        %v892 = vpack.c.b16 %v812, %v811
        %v893 = vpack.c.b16 %v814, %v813
        %v894 = vpack.c.b16 %v816, %v815
        %v895 = vpack.c.b16 %v818, %v817
        %v896 = vpack.c.b16 %v820, %v819
        %v897 = vpack.c.b16 %v822, %v821
        %v898 = vpack.c.b16 %v824, %v823
        %v899 = vpack.c.b16 %v826, %v825
        %v900 = vpack.c.b16 %v828, %v827
        %v901 = vpack.c.b16 %v830, %v829
        %v902 = vpack.c.b16 %v832, %v831
        %v903 = vpack.c.b16 %v834, %v833
        %v904 = vpack.c.b16 %v836, %v835
        %v905 = vpack.c.b16 %v838, %v837
        %v906 = vpack.c.b16 %v840, %v839
        %v907 = vpack.c.b16 %v842, %v841
        %v908 = vpack.c.b16 %v844, %v843
        %v909 = vpack.c.b16 %v846, %v845
        %v910 = vpack.c.b16 %v848, %v847
        %v911 = vpack.c.b16 %v850, %v849
        %v912 = vpack.c.b16 %v852, %v851
        %v913 = vpack.c.b16 %v854, %v853
        %v914 = vpack.c.b16 %v856, %v855
        %v915 = vpack.c.b16 %v858, %v857
        %v916 = vpack.c.b16 %v860, %v859
        %v917 = vpack.c.b16 %v862, %v861
        %v918 = vpack.c.b16 %v864, %v863
        %v919 = vpack.c.b16 %v866, %v865
        %v920 = vpack.c.b16 %v868, %v867
        %v921 = vpack.c.b16 %v870, %v869
        %v922 = vpack.c.b16 %v872, %v871
        %v923 = vpack.c.b16 %v874, %v873
        %vm973 = vcmask 130048
        %v975 = vsel %vm973, %v581, 0
        %v978 = vsel %vm973, %v588, 0
        %v981 = vsel %vm973, %v595, 0
        %v984 = vsel %vm973, %v602, 0
        %v987 = vsel %vm973, %v609, 0
        %v990 = vsel %vm973, %v616, 0
        %v993 = vsel %vm973, %v623, 0
        %v996 = vsel %vm973, %v630, 0
        %998 = vmatprep.subr.bf16.mxu0 0
        %999 = vmatpush1.bf16.msra.mxu0 %v875
        %1000 = vmatprep.subr.bf16.mxu0 0
        %1001 = vmatpush1.bf16.msra.mxu0 %v876
        %1002 = vmatprep.subr.bf16.mxu0 0
        %1003 = vmatpush1.bf16.msra.mxu0 %v877
        %1004 = vmatprep.subr.bf16.mxu0 0
        %1005 = vmatpush1.bf16.msra.mxu0 %v878
        %1006 = vmatprep.subr.bf16.mxu0 0
        %1007 = vmatpush1.bf16.msra.mxu0 %v879
        %1008 = vmatprep.subr.bf16.mxu0 0
        %1009 = vmatpush1.bf16.msra.mxu0 %v880
        %1010 = vmatprep.subr.bf16.mxu0 0
        %1011 = vmatpush1.bf16.msra.mxu0 %v881
        %1012 = vmatprep.subr.bf16.mxu0 0
        %1013 = vmatpush1.bf16.msra.mxu0 %v882
        %1014 = vmatprep.subr.bf16.mxu0 0
        %1015 = vmatpush1.bf16.msra.mxu0 %v883
        %1016 = vmatprep.subr.bf16.mxu0 0
        %1017 = vmatpush1.bf16.msra.mxu0 %v884
        %1018 = vmatprep.subr.bf16.mxu0 0
        %1019 = vmatpush1.bf16.msra.mxu0 %v885
        %1020 = vmatprep.subr.bf16.mxu0 0
        %1021 = vmatpush1.bf16.msra.mxu0 %v886
        %1022 = vmatprep.subr.bf16.mxu0 0
        %1023 = vmatpush1.bf16.msra.mxu0 %v887
        %1024 = vmatprep.subr.bf16.mxu0 0
        %1025 = vmatpush1.bf16.msra.mxu0 %v888
        %1026 = vmatprep.subr.bf16.mxu0 0
        %1027 = vmatpush1.bf16.msra.mxu0 %v889
        %1028 = vmatprep.subr.bf16.mxu0 0
        %1029 = vmatpush1.bf16.msra.mxu0 %v890
        %1030 = vmatprep.mubr.bf16.mxu0 %v576
        %1031 = vmatmul.mubr.bf16.gmra.mrb[0].mxu0 %v575
        %v1032 = vpop.f32.mrb[0].mxu0
        %v1033 = vadd.f32 %v397, %v1032
        %v1034 = vpop.f32.mrb[0].mxu0
        %v1035 = vpop.f32.mrb[0].mxu0
        %v1036 = vadd.f32 %v397, %v1035
        %v1037 = vpop.f32.mrb[0].mxu0
        %1038 = vmatprep.mubr.bf16.mxu0 %v583
        %1039 = vmatmul.mubr.bf16.gmra.mrb[0].mxu0 %v582
        %v1040 = vpop.f32.mrb[0].mxu0
        %v1041 = vadd.f32 %v397, %v1040
        %v1042 = vpop.f32.mrb[0].mxu0
        %v1043 = vpop.f32.mrb[0].mxu0
        %v1044 = vadd.f32 %v397, %v1043
        %v1045 = vpop.f32.mrb[0].mxu0
        %1046 = vmatprep.mubr.bf16.mxu0 %v590
        %1047 = vmatmul.mubr.bf16.gmra.mrb[0].mxu0 %v589
        %v1048 = vpop.f32.mrb[0].mxu0
        %v1049 = vadd.f32 %v397, %v1048
        %v1050 = vpop.f32.mrb[0].mxu0
        %v1051 = vpop.f32.mrb[0].mxu0
        %v1052 = vadd.f32 %v397, %v1051
        %v1053 = vpop.f32.mrb[0].mxu0
        %1054 = vmatprep.mubr.bf16.mxu0 %v597
        %1055 = vmatmul.mubr.bf16.gmra.mrb[0].mxu0 %v596
        %v1056 = vpop.f32.mrb[0].mxu0
        %v1057 = vadd.f32 %v397, %v1056
        %v1058 = vpop.f32.mrb[0].mxu0
        %v1059 = vpop.f32.mrb[0].mxu0
        %v1060 = vadd.f32 %v397, %v1059
        %v1061 = vpop.f32.mrb[0].mxu0
        %1062 = vmatprep.mubr.bf16.mxu0 %v604
        %1063 = vmatmul.mubr.bf16.gmra.mrb[0].mxu0 %v603
        %v1064 = vpop.f32.mrb[0].mxu0
        %v1065 = vadd.f32 %v397, %v1064
        %v1066 = vpop.f32.mrb[0].mxu0
        %v1067 = vpop.f32.mrb[0].mxu0
        %v1068 = vadd.f32 %v397, %v1067
        %v1069 = vpop.f32.mrb[0].mxu0
        %1070 = vmatprep.mubr.bf16.mxu0 %v611
        %1071 = vmatmul.mubr.bf16.gmra.mrb[0].mxu0 %v610
        %v1072 = vpop.f32.mrb[0].mxu0
        %v1073 = vadd.f32 %v397, %v1072
        %v1074 = vpop.f32.mrb[0].mxu0
        %v1075 = vpop.f32.mrb[0].mxu0
        %v1076 = vadd.f32 %v397, %v1075
        %v1077 = vpop.f32.mrb[0].mxu0
        %1078 = vmatprep.mubr.bf16.mxu0 %v618
        %1079 = vmatmul.mubr.bf16.gmra.mrb[0].mxu0 %v617
        %v1080 = vpop.f32.mrb[0].mxu0
        %v1081 = vadd.f32 %v397, %v1080
        %v1082 = vpop.f32.mrb[0].mxu0
        %v1083 = vpop.f32.mrb[0].mxu0
        %v1084 = vadd.f32 %v397, %v1083
        %v1085 = vpop.f32.mrb[0].mxu0
        %1086 = vmatprep.mubr.bf16.mxu0 %v625
        %1087 = vmatmul.mubr.bf16.gmra.mrb[0].mxu0 %v624
        %v1088 = vpop.f32.mrb[0].mxu0
        %v1089 = vadd.f32 %v397, %v1088
        %v1090 = vpop.f32.mrb[0].mxu0
        %v1091 = vpop.f32.mrb[0].mxu0
        %v1092 = vadd.f32 %v397, %v1091
        %v1093 = vpop.f32.mrb[0].mxu0
        %1094 = vdwg.mxu0
        %1095 = vmatprep.subr.bf16.mxu0 0
        %1096 = vmatpush1.bf16.msra.mxu0 %v891
        %1097 = vmatprep.subr.bf16.mxu0 0
        %1098 = vmatpush1.bf16.msra.mxu0 %v892
        %1099 = vmatprep.subr.bf16.mxu0 0
        %1100 = vmatpush1.bf16.msra.mxu0 %v893
        %1101 = vmatprep.subr.bf16.mxu0 0
        %1102 = vmatpush1.bf16.msra.mxu0 %v894
        %1103 = vmatprep.subr.bf16.mxu0 0
        %1104 = vmatpush1.bf16.msra.mxu0 %v895
        %1105 = vmatprep.subr.bf16.mxu0 0
        %1106 = vmatpush1.bf16.msra.mxu0 %v896
        %1107 = vmatprep.subr.bf16.mxu0 0
        %1108 = vmatpush1.bf16.msra.mxu0 %v897
        %1109 = vmatprep.subr.bf16.mxu0 0
        %1110 = vmatpush1.bf16.msra.mxu0 %v898
        %1111 = vmatprep.subr.bf16.mxu0 0
        %1112 = vmatpush1.bf16.msra.mxu0 %v899
        %1113 = vmatprep.subr.bf16.mxu0 0
        %1114 = vmatpush1.bf16.msra.mxu0 %v900
        %1115 = vmatprep.subr.bf16.mxu0 0
        %1116 = vmatpush1.bf16.msra.mxu0 %v901
        %1117 = vmatprep.subr.bf16.mxu0 0
        %1118 = vmatpush1.bf16.msra.mxu0 %v902
        %1119 = vmatprep.subr.bf16.mxu0 0
        %1120 = vmatpush1.bf16.msra.mxu0 %v903
        %1121 = vmatprep.subr.bf16.mxu0 0
        %1122 = vmatpush1.bf16.msra.mxu0 %v904
        %1123 = vmatprep.subr.bf16.mxu0 0
        %1124 = vmatpush1.bf16.msra.mxu0 %v905
        %1125 = vmatprep.subr.bf16.mxu0 0
        %1126 = vmatpush1.bf16.msra.mxu0 %v906
        %1127 = vmatprep.mubr.bf16.mxu0 %v578
        %1128 = vmatmul.mubr.bf16.gmra.mrb[0].mxu0 %v577
        %v1129 = vpop.f32.mrb[0].mxu0
        %v1130 = vadd.f32 %v1033, %v1129
        %v1131 = vpop.f32.mrb[0].mxu0
        %v1132 = vpop.f32.mrb[0].mxu0
        %v1133 = vadd.f32 %v1036, %v1132
        %v1134 = vpop.f32.mrb[0].mxu0
        %1135 = vmatprep.mubr.bf16.mxu0 %v585
        %1136 = vmatmul.mubr.bf16.gmra.mrb[0].mxu0 %v584
        %v1137 = vpop.f32.mrb[0].mxu0
        %v1138 = vadd.f32 %v1041, %v1137
        %v1139 = vpop.f32.mrb[0].mxu0
        %v1140 = vpop.f32.mrb[0].mxu0
        %v1141 = vadd.f32 %v1044, %v1140
        %v1142 = vpop.f32.mrb[0].mxu0
        %1143 = vmatprep.mubr.bf16.mxu0 %v592
        %1144 = vmatmul.mubr.bf16.gmra.mrb[0].mxu0 %v591
        %v1145 = vpop.f32.mrb[0].mxu0
        %v1146 = vadd.f32 %v1049, %v1145
        %v1147 = vpop.f32.mrb[0].mxu0
        %v1148 = vpop.f32.mrb[0].mxu0
        %v1149 = vadd.f32 %v1052, %v1148
        %v1150 = vpop.f32.mrb[0].mxu0
        %1151 = vmatprep.mubr.bf16.mxu0 %v599
        %1152 = vmatmul.mubr.bf16.gmra.mrb[0].mxu0 %v598
        %v1153 = vpop.f32.mrb[0].mxu0
        %v1154 = vadd.f32 %v1057, %v1153
        %v1155 = vpop.f32.mrb[0].mxu0
        %v1156 = vpop.f32.mrb[0].mxu0
        %v1157 = vadd.f32 %v1060, %v1156
        %v1158 = vpop.f32.mrb[0].mxu0
        %1159 = vmatprep.mubr.bf16.mxu0 %v606
        %1160 = vmatmul.mubr.bf16.gmra.mrb[0].mxu0 %v605
        %v1161 = vpop.f32.mrb[0].mxu0
        %v1162 = vadd.f32 %v1065, %v1161
        %v1163 = vpop.f32.mrb[0].mxu0
        %v1164 = vpop.f32.mrb[0].mxu0
        %v1165 = vadd.f32 %v1068, %v1164
        %v1166 = vpop.f32.mrb[0].mxu0
        %1167 = vmatprep.mubr.bf16.mxu0 %v613
        %1168 = vmatmul.mubr.bf16.gmra.mrb[0].mxu0 %v612
        %v1169 = vpop.f32.mrb[0].mxu0
        %v1170 = vadd.f32 %v1073, %v1169
        %v1171 = vpop.f32.mrb[0].mxu0
        %v1172 = vpop.f32.mrb[0].mxu0
        %v1173 = vadd.f32 %v1076, %v1172
        %v1174 = vpop.f32.mrb[0].mxu0
        %1175 = vmatprep.mubr.bf16.mxu0 %v620
        %1176 = vmatmul.mubr.bf16.gmra.mrb[0].mxu0 %v619
        %v1177 = vpop.f32.mrb[0].mxu0
        %v1178 = vadd.f32 %v1081, %v1177
        %v1179 = vpop.f32.mrb[0].mxu0
        %v1180 = vpop.f32.mrb[0].mxu0
        %v1181 = vadd.f32 %v1084, %v1180
        %v1182 = vpop.f32.mrb[0].mxu0
        %1183 = vmatprep.mubr.bf16.mxu0 %v627
        %1184 = vmatmul.mubr.bf16.gmra.mrb[0].mxu0 %v626
        %v1185 = vpop.f32.mrb[0].mxu0
        %v1186 = vadd.f32 %v1089, %v1185
        %v1187 = vpop.f32.mrb[0].mxu0
        %v1188 = vpop.f32.mrb[0].mxu0
        %v1189 = vadd.f32 %v1092, %v1188
        %v1190 = vpop.f32.mrb[0].mxu0
        %1191 = vdwg.mxu0
        %1192 = vmatprep.subr.bf16.mxu0 0
        %1193 = vmatpush1.bf16.msra.mxu0 %v907
        %1194 = vmatprep.subr.bf16.mxu0 0
        %1195 = vmatpush1.bf16.msra.mxu0 %v908
        %1196 = vmatprep.subr.bf16.mxu0 0
        %1197 = vmatpush1.bf16.msra.mxu0 %v909
        %1198 = vmatprep.subr.bf16.mxu0 0
        %1199 = vmatpush1.bf16.msra.mxu0 %v910
        %1200 = vmatprep.subr.bf16.mxu0 0
        %1201 = vmatpush1.bf16.msra.mxu0 %v911
        %1202 = vmatprep.subr.bf16.mxu0 0
        %1203 = vmatpush1.bf16.msra.mxu0 %v912
        %1204 = vmatprep.subr.bf16.mxu0 0
        %1205 = vmatpush1.bf16.msra.mxu0 %v913
        %1206 = vmatprep.subr.bf16.mxu0 0
        %1207 = vmatpush1.bf16.msra.mxu0 %v914
        %1208 = vmatprep.subr.bf16.mxu0 0
        %1209 = vmatpush1.bf16.msra.mxu0 %v915
        %1210 = vmatprep.subr.bf16.mxu0 0
        %1211 = vmatpush1.bf16.msra.mxu0 %v916
        %1212 = vmatprep.subr.bf16.mxu0 0
        %1213 = vmatpush1.bf16.msra.mxu0 %v917
        %1214 = vmatprep.subr.bf16.mxu0 0
        %1215 = vmatpush1.bf16.msra.mxu0 %v918
        %1216 = vmatprep.subr.bf16.mxu0 0
        %1217 = vmatpush1.bf16.msra.mxu0 %v919
        %1218 = vmatprep.subr.bf16.mxu0 0
        %1219 = vmatpush1.bf16.msra.mxu0 %v920
        %1220 = vmatprep.subr.bf16.mxu0 0
        %1221 = vmatpush1.bf16.msra.mxu0 %v921
        %1222 = vmatprep.subr.bf16.mxu0 0
        %1223 = vmatpush1.bf16.msra.mxu0 %v922
        %1224 = vmatprep.mubr.bf16.mxu0 %v580
        %1225 = vmatmul.mubr.bf16.gmra.mrb[0].mxu0 %v579
        %v1226 = vpop.f32.mrb[0].mxu0
        %v1227 = vadd.f32 %v1130, %v1226
        %v1228 = vpop.f32.mrb[0].mxu0
        %v1229 = vpop.f32.mrb[0].mxu0
        %v1230 = vadd.f32 %v1133, %v1229
        %v1231 = vpop.f32.mrb[0].mxu0
        %1232 = vmatprep.mubr.bf16.mxu0 %v587
        %1233 = vmatmul.mubr.bf16.gmra.mrb[0].mxu0 %v586
        %v1234 = vpop.f32.mrb[0].mxu0
        %v1235 = vadd.f32 %v1138, %v1234
        %v1236 = vpop.f32.mrb[0].mxu0
        %v1237 = vpop.f32.mrb[0].mxu0
        %v1238 = vadd.f32 %v1141, %v1237
        %v1239 = vpop.f32.mrb[0].mxu0
        %1240 = vmatprep.mubr.bf16.mxu0 %v594
        %1241 = vmatmul.mubr.bf16.gmra.mrb[0].mxu0 %v593
        %v1242 = vpop.f32.mrb[0].mxu0
        %v1243 = vadd.f32 %v1146, %v1242
        %v1244 = vpop.f32.mrb[0].mxu0
        %v1245 = vpop.f32.mrb[0].mxu0
        %v1246 = vadd.f32 %v1149, %v1245
        %v1247 = vpop.f32.mrb[0].mxu0
        %1248 = vmatprep.mubr.bf16.mxu0 %v601
        %1249 = vmatmul.mubr.bf16.gmra.mrb[0].mxu0 %v600
        %v1250 = vpop.f32.mrb[0].mxu0
        %v1251 = vadd.f32 %v1154, %v1250
        %v1252 = vpop.f32.mrb[0].mxu0
        %v1253 = vpop.f32.mrb[0].mxu0
        %v1254 = vadd.f32 %v1157, %v1253
        %v1255 = vpop.f32.mrb[0].mxu0
        %1256 = vmatprep.mubr.bf16.mxu0 %v608
        %1257 = vmatmul.mubr.bf16.gmra.mrb[0].mxu0 %v607
        %v1258 = vpop.f32.mrb[0].mxu0
        %v1259 = vadd.f32 %v1162, %v1258
        %v1260 = vpop.f32.mrb[0].mxu0
        %v1261 = vpop.f32.mrb[0].mxu0
        %v1262 = vadd.f32 %v1165, %v1261
        %v1263 = vpop.f32.mrb[0].mxu0
        %1264 = vmatprep.mubr.bf16.mxu0 %v615
        %1265 = vmatmul.mubr.bf16.gmra.mrb[0].mxu0 %v614
        %v1266 = vpop.f32.mrb[0].mxu0
        %v1267 = vadd.f32 %v1170, %v1266
        %v1268 = vpop.f32.mrb[0].mxu0
        %v1269 = vpop.f32.mrb[0].mxu0
        %v1270 = vadd.f32 %v1173, %v1269
        %v1271 = vpop.f32.mrb[0].mxu0
        %1272 = vmatprep.mubr.bf16.mxu0 %v622
        %1273 = vmatmul.mubr.bf16.gmra.mrb[0].mxu0 %v621
        %v1274 = vpop.f32.mrb[0].mxu0
        %v1275 = vadd.f32 %v1178, %v1274
        %v1276 = vpop.f32.mrb[0].mxu0
        %v1277 = vpop.f32.mrb[0].mxu0
        %v1278 = vadd.f32 %v1181, %v1277
        %v1279 = vpop.f32.mrb[0].mxu0
        %1280 = vmatprep.mubr.bf16.mxu0 %v629
        %1281 = vmatmul.mubr.bf16.gmra.mrb[0].mxu0 %v628
        %v1282 = vpop.f32.mrb[0].mxu0
        %v1283 = vadd.f32 %v1186, %v1282
        %v1284 = vpop.f32.mrb[0].mxu0
        %v1285 = vpop.f32.mrb[0].mxu0
        %v1286 = vadd.f32 %v1189, %v1285
        %v1287 = vpop.f32.mrb[0].mxu0
        %1288 = vdwg.mxu0
        %1289 = vmatprep.subr.bf16.mxu0 0
        %1290 = vmatpush1.bf16.msra.mxu0 %v923
        %1291 = vmatprep.subr.bf16.mxu0 0
        %1292 = vmatpush1.bf16.msra.mxu0 0
        %1293 = vmatprep.subr.bf16.mxu0 0
        %1294 = vmatpush1.bf16.msra.mxu0 0
        %1295 = vmatprep.subr.bf16.mxu0 0
        %1296 = vmatpush1.bf16.msra.mxu0 0
        %1297 = vmatprep.subr.bf16.mxu0 0
        %1298 = vmatpush1.bf16.msra.mxu0 0
        %1299 = vmatprep.subr.bf16.mxu0 0
        %1300 = vmatpush1.bf16.msra.mxu0 0
        %1301 = vmatprep.subr.bf16.mxu0 0
        %1302 = vmatpush1.bf16.msra.mxu0 0
        %1303 = vmatprep.subr.bf16.mxu0 0
        %1304 = vmatpush1.bf16.msra.mxu0 0
        %1305 = vmatprep.subr.bf16.mxu0 0
        %1306 = vmatpush1.bf16.msra.mxu0 0
        %1307 = vmatprep.subr.bf16.mxu0 0
        %1308 = vmatpush1.bf16.msra.mxu0 0
        %1309 = vmatprep.subr.bf16.mxu0 0
        %1310 = vmatpush1.bf16.msra.mxu0 0
        %1311 = vmatprep.subr.bf16.mxu0 0
        %1312 = vmatpush1.bf16.msra.mxu0 0
        %1313 = vmatprep.subr.bf16.mxu0 0
        %1314 = vmatpush1.bf16.msra.mxu0 0
        %1315 = vmatprep.subr.bf16.mxu0 0
        %1316 = vmatpush1.bf16.msra.mxu0 0
        %1317 = vmatprep.subr.bf16.mxu0 0
        %1318 = vmatpush1.bf16.msra.mxu0 0
        %1319 = vmatprep.subr.bf16.mxu0 0
        %1320 = vmatpush1.bf16.msra.mxu0 0
        %1321 = vmatprep.mubr.bf16.mxu0 0
        %1322 = vmatmul.mubr.bf16.gmra.mrb[0].mxu0 %v975
        %v1323 = vpop.f32.mrb[0].mxu0
        %v1324 = vadd.f32 %v1227, %v1323
        %v1325 = vpop.f32.mrb[0].mxu0
        %v1326 = vpop.f32.mrb[0].mxu0
        %v1327 = vadd.f32 %v1230, %v1326
        %v1328 = vpop.f32.mrb[0].mxu0
        %1329 = vmatprep.mubr.bf16.mxu0 0
        %1330 = vmatmul.mubr.bf16.gmra.mrb[0].mxu0 %v978
        %v1331 = vpop.f32.mrb[0].mxu0
        %v1332 = vadd.f32 %v1235, %v1331
        %v1333 = vpop.f32.mrb[0].mxu0
        %v1334 = vpop.f32.mrb[0].mxu0
        %v1335 = vadd.f32 %v1238, %v1334
        %v1336 = vpop.f32.mrb[0].mxu0
        %1337 = vmatprep.mubr.bf16.mxu0 0
        %1338 = vmatmul.mubr.bf16.gmra.mrb[0].mxu0 %v981
        %v1339 = vpop.f32.mrb[0].mxu0
        %v1340 = vadd.f32 %v1243, %v1339
        %v1341 = vpop.f32.mrb[0].mxu0
        %v1342 = vpop.f32.mrb[0].mxu0
        %v1343 = vadd.f32 %v1246, %v1342
        %v1344 = vpop.f32.mrb[0].mxu0
        %1345 = vmatprep.mubr.bf16.mxu0 0
        %1346 = vmatmul.mubr.bf16.gmra.mrb[0].mxu0 %v984
        %v1347 = vpop.f32.mrb[0].mxu0
        %v1348 = vadd.f32 %v1251, %v1347
        %v1349 = vpop.f32.mrb[0].mxu0
        %v1350 = vpop.f32.mrb[0].mxu0
        %v1351 = vadd.f32 %v1254, %v1350
        %v1352 = vpop.f32.mrb[0].mxu0
        %1353 = vmatprep.mubr.bf16.mxu0 0
        %1354 = vmatmul.mubr.bf16.gmra.mrb[0].mxu0 %v987
        %v1355 = vpop.f32.mrb[0].mxu0
        %v1356 = vadd.f32 %v1259, %v1355
        %v1357 = vpop.f32.mrb[0].mxu0
        %v1358 = vpop.f32.mrb[0].mxu0
        %v1359 = vadd.f32 %v1262, %v1358
        %v1360 = vpop.f32.mrb[0].mxu0
        %1361 = vmatprep.mubr.bf16.mxu0 0
        %1362 = vmatmul.mubr.bf16.gmra.mrb[0].mxu0 %v990
        %v1363 = vpop.f32.mrb[0].mxu0
        %v1364 = vadd.f32 %v1267, %v1363
        %v1365 = vpop.f32.mrb[0].mxu0
        %v1366 = vpop.f32.mrb[0].mxu0
        %v1367 = vadd.f32 %v1270, %v1366
        %v1368 = vpop.f32.mrb[0].mxu0
        %1369 = vmatprep.mubr.bf16.mxu0 0
        %1370 = vmatmul.mubr.bf16.gmra.mrb[0].mxu0 %v993
        %v1371 = vpop.f32.mrb[0].mxu0
        %v1372 = vadd.f32 %v1275, %v1371
        %v1373 = vpop.f32.mrb[0].mxu0
        %v1374 = vpop.f32.mrb[0].mxu0
        %v1375 = vadd.f32 %v1278, %v1374
        %v1376 = vpop.f32.mrb[0].mxu0
        %1377 = vmatprep.mubr.bf16.mxu0 0
        %1378 = vmatmul.mubr.bf16.gmra.mrb[0].mxu0 %v996
        %v1379 = vpop.f32.mrb[0].mxu0
        %v1380 = vadd.f32 %v1283, %v1379
        %v1381 = vpop.f32.mrb[0].mxu0
        %v1382 = vpop.f32.mrb[0].mxu0
        %v1383 = vadd.f32 %v1286, %v1382
        %v1384 = vpop.f32.mrb[0].mxu0
        %1385 = vdwg.mxu0
        %v1386 = vmax.f32 %v1324, 0.0
        %v1387 = vmax.f32 %v1327, 0.0
        %v1388 = vmax.f32 %v1332, 0.0
        %v1389 = vmax.f32 %v1335, 0.0
        %v1390 = vmax.f32 %v1340, 0.0
        %v1391 = vmax.f32 %v1343, 0.0
        %v1392 = vmax.f32 %v1348, 0.0
        %v1393 = vmax.f32 %v1351, 0.0
        %v1394 = vmax.f32 %v1356, 0.0
        %v1395 = vmax.f32 %v1359, 0.0
        %v1396 = vmax.f32 %v1364, 0.0
        %v1397 = vmax.f32 %v1367, 0.0
        %v1398 = vmax.f32 %v1372, 0.0
        %v1399 = vmax.f32 %v1375, 0.0
        %v1400 = vmax.f32 %v1380, 0.0
        %v1401 = vmax.f32 %v1383, 0.0
        %v1402 = vld [vmem:[%s3] sm:$0x1]
        %v1404 = vlaneseq
        %v1405 = vshrl.u32 %v1404, 7
        %v1406 = vsub.s32 0, %v1405
        %v1407 = vrot.slane %v1402, %v1406
        %v1409 = vmul.f32 %v1386, %v1407
        %v1410 = vmul.f32 %v1387, %v1407
        %v1411 = vmul.f32 %v1388, %v1407
        %v1412 = vmul.f32 %v1389, %v1407
        %v1413 = vmul.f32 %v1390, %v1407
        %v1414 = vmul.f32 %v1391, %v1407
        %v1415 = vmul.f32 %v1392, %v1407
        %v1416 = vmul.f32 %v1393, %v1407
        %v1417 = vmul.f32 %v1394, %v1407
        %v1418 = vmul.f32 %v1395, %v1407
        %v1419 = vmul.f32 %v1396, %v1407
        %v1420 = vmul.f32 %v1397, %v1407
        %v1421 = vmul.f32 %v1398, %v1407
        %v1422 = vmul.f32 %v1399, %v1407
        %v1423 = vmul.f32 %v1400, %v1407
        %v1424 = vmul.f32 %v1401, %v1407
        %1425 = vadd.xlane.f32.xlu0 %v1409
        %v1426 = vpop.xlane.xlu0 %1425
        %1427 = vadd.xlane.f32.xlu0 %v1410
        %v1428 = vpop.xlane.xlu0 %1427
        %1429 = vadd.xlane.f32.xlu0 %v1411
        %v1430 = vpop.xlane.xlu0 %1429
        %1431 = vadd.xlane.f32.xlu0 %v1412
        %v1432 = vpop.xlane.xlu0 %1431
        %1433 = vadd.xlane.f32.xlu0 %v1413
        %v1434 = vpop.xlane.xlu0 %1433
        %1435 = vadd.xlane.f32.xlu0 %v1414
        %v1436 = vpop.xlane.xlu0 %1435
        %1437 = vadd.xlane.f32.xlu0 %v1415
        %v1438 = vpop.xlane.xlu0 %1437
        %1439 = vadd.xlane.f32.xlu0 %v1416
        %v1440 = vpop.xlane.xlu0 %1439
        %1441 = vadd.xlane.f32.xlu0 %v1417
        %v1442 = vpop.xlane.xlu0 %1441
        %1443 = vadd.xlane.f32.xlu0 %v1418
        %v1444 = vpop.xlane.xlu0 %1443
        %1445 = vadd.xlane.f32.xlu0 %v1419
        %v1446 = vpop.xlane.xlu0 %1445
        %1447 = vadd.xlane.f32.xlu0 %v1420
        %v1448 = vpop.xlane.xlu0 %1447
        %1449 = vadd.xlane.f32.xlu0 %v1421
        %v1450 = vpop.xlane.xlu0 %1449
        %1451 = vadd.xlane.f32.xlu0 %v1422
        %v1452 = vpop.xlane.xlu0 %1451
        %1453 = vadd.xlane.f32.xlu0 %v1423
        %v1454 = vpop.xlane.xlu0 %1453
        %1455 = vadd.xlane.f32.xlu0 %v1424
        %v1456 = vpop.xlane.xlu0 %1455
        %v1457 = vld [vmem:[#allocation2] sm:$0x1]
        %1459 = vset.pattern.permute.xlu0 0
        %1460 = vperm.xlu0 %1459, %v1457
        %v1461 = vpop.permute.xlu0 %1460
        %v1463 = vlaneseq
        %v1464 = vshrl.u32 %v1463, 7
        %v1465 = vsub.s32 0, %v1464
        %v1466 = vrot.slane %v1461, %v1465
        %v1467 = vadd.f32 %v1426, %v1466
        %v1468 = vadd.f32 %v1428, %v1466
        %v1469 = vadd.f32 %v1430, %v1466
        %v1470 = vadd.f32 %v1432, %v1466
        %v1471 = vadd.f32 %v1434, %v1466
        %v1472 = vadd.f32 %v1436, %v1466
        %v1473 = vadd.f32 %v1438, %v1466
        %v1474 = vadd.f32 %v1440, %v1466
        %v1475 = vadd.f32 %v1442, %v1466
        %v1476 = vadd.f32 %v1444, %v1466
        %v1477 = vadd.f32 %v1446, %v1466
        %v1478 = vadd.f32 %v1448, %v1466
        %v1479 = vadd.f32 %v1450, %v1466
        %v1480 = vadd.f32 %v1452, %v1466
        %v1481 = vadd.f32 %v1454, %v1466
        %v1482 = vadd.f32 %v1456, %v1466
        %v1483 = vsub.f32 0.0, %v1467
        %v1484 = vsub.f32 0.0, %v1468
        %v1485 = vsub.f32 0.0, %v1469
        %v1486 = vsub.f32 0.0, %v1470
        %v1487 = vsub.f32 0.0, %v1471
        %v1488 = vsub.f32 0.0, %v1472
        %v1489 = vsub.f32 0.0, %v1473
        %v1490 = vsub.f32 0.0, %v1474
        %v1491 = vsub.f32 0.0, %v1475
        %v1492 = vsub.f32 0.0, %v1476
        %v1493 = vsub.f32 0.0, %v1477
        %v1494 = vsub.f32 0.0, %v1478
        %v1495 = vsub.f32 0.0, %v1479
        %v1496 = vsub.f32 0.0, %v1480
        %v1497 = vsub.f32 0.0, %v1481
        %v1498 = vsub.f32 0.0, %v1482
        %v1499 = vmul.f32 %v1483, 1.442695
        %v1500 = vpow.pop %v1499
        %v1501 = vmul.f32 %v1484, 1.442695
        %v1502 = vpow.pop %v1501
        %v1503 = vmul.f32 %v1485, 1.442695
        %v1504 = vpow.pop %v1503
        %v1505 = vmul.f32 %v1486, 1.442695
        %v1506 = vpow.pop %v1505
        %v1507 = vmul.f32 %v1487, 1.442695
        %v1508 = vpow.pop %v1507
        %v1509 = vmul.f32 %v1488, 1.442695
        %v1510 = vpow.pop %v1509
        %v1511 = vmul.f32 %v1489, 1.442695
        %v1512 = vpow.pop %v1511
        %v1513 = vmul.f32 %v1490, 1.442695
        %v1514 = vpow.pop %v1513
        %v1515 = vmul.f32 %v1491, 1.442695
        %v1516 = vpow.pop %v1515
        %v1517 = vmul.f32 %v1492, 1.442695
        %v1518 = vpow.pop %v1517
        %v1519 = vmul.f32 %v1493, 1.442695
        %v1520 = vpow.pop %v1519
        %v1521 = vmul.f32 %v1494, 1.442695
        %v1522 = vpow.pop %v1521
        %v1523 = vmul.f32 %v1495, 1.442695
        %v1524 = vpow.pop %v1523
        %v1525 = vmul.f32 %v1496, 1.442695
        %v1526 = vpow.pop %v1525
        %v1527 = vmul.f32 %v1497, 1.442695
        %v1528 = vpow.pop %v1527
        %v1529 = vmul.f32 %v1498, 1.442695
        %v1530 = vpow.pop %v1529
        %v1531 = vadd.f32 %v1500, 1.0
        %v1532 = vadd.f32 %v1502, 1.0
        %v1533 = vadd.f32 %v1504, 1.0
        %v1534 = vadd.f32 %v1506, 1.0
        %v1535 = vadd.f32 %v1508, 1.0
        %v1536 = vadd.f32 %v1510, 1.0
        %v1537 = vadd.f32 %v1512, 1.0
        %v1538 = vadd.f32 %v1514, 1.0
        %v1539 = vadd.f32 %v1516, 1.0
        %v1540 = vadd.f32 %v1518, 1.0
        %v1541 = vadd.f32 %v1520, 1.0
        %v1542 = vadd.f32 %v1522, 1.0
        %v1543 = vadd.f32 %v1524, 1.0
        %v1544 = vadd.f32 %v1526, 1.0
        %v1545 = vadd.f32 %v1528, 1.0
        %v1546 = vadd.f32 %v1530, 1.0
        %v1547 = vrcp.pop %v1531
        %v1548 = vrcp.pop %v1532
        %v1549 = vrcp.pop %v1533
        %v1550 = vrcp.pop %v1534
        %v1551 = vrcp.pop %v1535
        %v1552 = vrcp.pop %v1536
        %v1553 = vrcp.pop %v1537
        %v1554 = vrcp.pop %v1538
        %v1555 = vrcp.pop %v1539
        %v1556 = vrcp.pop %v1540
        %v1557 = vrcp.pop %v1541
        %v1558 = vrcp.pop %v1542
        %v1559 = vrcp.pop %v1543
        %v1560 = vrcp.pop %v1544
        %v1561 = vrcp.pop %v1545
        %v1562 = vrcp.pop %v1546
        %v1579 = vlaneseq
        %v1580 = vand.u32 %v1579, 127
        %v1581 = vlaneseq
        %v1582 = vshrl.u32 %v1581, 7
        %v1583 = vsub.s32 %v1580, %v1582
        %v1584 = vrot.slane %v1547, %v1583
        %v1585 = vadd.s32 %v1580, 4294967288
        %v1586 = vlaneseq
        %v1587 = vshrl.u32 %v1586, 7
        %v1588 = vsub.s32 %v1585, %v1587
        %v1589 = vrot.slane %v1548, %v1588
        %vm1590 = vcmask 130112
        %v1591 = vsel %vm1590, %v1589, %v1584
        %v1592 = vadd.s32 %v1580, 4294967280
        %v1593 = vlaneseq
        %v1594 = vshrl.u32 %v1593, 7
        %v1595 = vsub.s32 %v1592, %v1594
        %v1596 = vrot.slane %v1549, %v1595
        %vm1597 = vcmask 195712
        %v1598 = vsel %vm1597, %v1596, %v1591
        %v1599 = vadd.s32 %v1580, 4294967272
        %v1600 = vlaneseq
        %v1601 = vshrl.u32 %v1600, 7
        %v1602 = vsub.s32 %v1599, %v1601
        %v1603 = vrot.slane %v1550, %v1602
        %vm1604 = vcmask 261312
        %v1605 = vsel %vm1604, %v1603, %v1598
        %v1606 = vadd.s32 %v1580, 4294967264
        %v1607 = vlaneseq
        %v1608 = vshrl.u32 %v1607, 7
        %v1609 = vsub.s32 %v1606, %v1608
        %v1610 = vrot.slane %v1551, %v1609
        %vm1611 = vcmask 326912
        %v1612 = vsel %vm1611, %v1610, %v1605
        %v1613 = vadd.s32 %v1580, 4294967256
        %v1614 = vlaneseq
        %v1615 = vshrl.u32 %v1614, 7
        %v1616 = vsub.s32 %v1613, %v1615
        %v1617 = vrot.slane %v1552, %v1616
        %vm1618 = vcmask 392512
        %v1619 = vsel %vm1618, %v1617, %v1612
        %v1620 = vadd.s32 %v1580, 4294967248
        %v1621 = vlaneseq
        %v1622 = vshrl.u32 %v1621, 7
        %v1623 = vsub.s32 %v1620, %v1622
        %v1624 = vrot.slane %v1553, %v1623
        %vm1625 = vcmask 458112
        %v1626 = vsel %vm1625, %v1624, %v1619
        %v1627 = vadd.s32 %v1580, 4294967240
        %v1628 = vlaneseq
        %v1629 = vshrl.u32 %v1628, 7
        %v1630 = vsub.s32 %v1627, %v1629
        %v1631 = vrot.slane %v1554, %v1630
        %vm1632 = vcmask 523712
        %v1633 = vsel %vm1632, %v1631, %v1626
        %v1634 = vadd.s32 %v1580, 4294967232
        %v1635 = vlaneseq
        %v1636 = vshrl.u32 %v1635, 7
        %v1637 = vsub.s32 %v1634, %v1636
        %v1638 = vrot.slane %v1555, %v1637
        %vm1639 = vcmask 589312
        %v1640 = vsel %vm1639, %v1638, %v1633
        %v1641 = vadd.s32 %v1580, 4294967224
        %v1642 = vlaneseq
        %v1643 = vshrl.u32 %v1642, 7
        %v1644 = vsub.s32 %v1641, %v1643
        %v1645 = vrot.slane %v1556, %v1644
        %vm1646 = vcmask 654912
        %v1647 = vsel %vm1646, %v1645, %v1640
        %v1648 = vadd.s32 %v1580, 4294967216
        %v1649 = vlaneseq
        %v1650 = vshrl.u32 %v1649, 7
        %v1651 = vsub.s32 %v1648, %v1650
        %v1652 = vrot.slane %v1557, %v1651
        %vm1653 = vcmask 720512
        %v1654 = vsel %vm1653, %v1652, %v1647
        %v1655 = vadd.s32 %v1580, 4294967208
        %v1656 = vlaneseq
        %v1657 = vshrl.u32 %v1656, 7
        %v1658 = vsub.s32 %v1655, %v1657
        %v1659 = vrot.slane %v1558, %v1658
        %vm1660 = vcmask 786112
        %v1661 = vsel %vm1660, %v1659, %v1654
        %v1662 = vadd.s32 %v1580, 4294967200
        %v1663 = vlaneseq
        %v1664 = vshrl.u32 %v1663, 7
        %v1665 = vsub.s32 %v1662, %v1664
        %v1666 = vrot.slane %v1559, %v1665
        %vm1667 = vcmask 851712
        %v1668 = vsel %vm1667, %v1666, %v1661
        %v1669 = vadd.s32 %v1580, 4294967192
        %v1670 = vlaneseq
        %v1671 = vshrl.u32 %v1670, 7
        %v1672 = vsub.s32 %v1669, %v1671
        %v1673 = vrot.slane %v1560, %v1672
        %vm1674 = vcmask 917312
        %v1675 = vsel %vm1674, %v1673, %v1668
        %v1676 = vadd.s32 %v1580, 4294967184
        %v1677 = vlaneseq
        %v1678 = vshrl.u32 %v1677, 7
        %v1679 = vsub.s32 %v1676, %v1678
        %v1680 = vrot.slane %v1561, %v1679
        %vm1681 = vcmask 982912
        %v1682 = vsel %vm1681, %v1680, %v1675
        %v1683 = vadd.s32 %v1580, 4294967176
        %v1684 = vlaneseq
        %v1685 = vshrl.u32 %v1684, 7
        %v1686 = vsub.s32 %v1683, %v1685
        %v1687 = vrot.slane %v1562, %v1686
        %vm1688 = vcmask 1048512
        %v1689 = vsel %vm1688, %v1687, %v1682
        %1691 = vst [vmem:[%s221] sm:$0x1] %v1689
        %s1692 = sand.u32 %s139, 1
        %s1693 = scalar_lea.sflag [#allocation4], %s1692
        %s1694 = sand.u32 %s139, 1
        %s1695 = scalar_lea.vmem [#allocation3], %s1694
        // Predicated region
        $region41: #{tpu_custom_call.1} parent=39 // pred_check
          %p1696 = pneg %p149
        $region42: #{tpu_custom_call.1} parent=39 // pred_check_branch
          %1698 = sbr.rel (%p1696) target = $region44
        $region43: #{tpu_custom_call.1} parent=39 // pred_region
          %s1700 = ssub.s32 16, 16
          %1701 = vsyncadd %s1693, %s1700
          %s1702 = smul.addr %s21, 16
          %s1703 = scalar_lea.hbm %s5, %s1702
          %s1705 = sshll.u32 %s1695, 4
          %s1706 = int_to_ptr.vmem [resolvable:$true] %s1705
          %1708 = dma.vmem_to_hbm [thread:$0]  %s1706, 16, %s1703, %s1693
        $region44: #{tpu_custom_call.1} parent=39 // pred_fallthru
          _
      $region40: #{tpu_custom_call.1} parent=5 // pred_fallthru
        _
      %p1709 = scmp.le.s32.totalorder 2, %s16
      // Predicated region
      $region45: #{tpu_custom_call.1} parent=5 // pred_check
        %p1710 = pneg %p1709
      $region46: #{tpu_custom_call.1} parent=5 // pred_check_branch
        %1712 = sbr.rel (%p1710) target = $region48
      $region47: #{tpu_custom_call.1} parent=5 // pred_region
        %s1713 = ssub.s32 %s16, 2
        // Predicated region
        $region49: #{tpu_custom_call.1} parent=47 // pred_check
          %p1714 = pneg %p155
        $region50: #{tpu_custom_call.1} parent=47 // pred_check_branch
          %1716 = sbr.rel (%p1714) target = $region52
        $region51: #{tpu_custom_call.1} parent=47 // pred_region
          %s1717 = sand.u32 %s140, 1
          %s1718 = scalar_lea.sflag [#allocation4], %s1717
          %s1719 = sand.u32 %s140, 1
          %s1720 = scalar_lea.vmem [#allocation3], %s1719
          %1721 = dma.done %s1718, 16
        $region52: #{tpu_custom_call.1} parent=47 // pred_fallthru
          _
      $region48: #{tpu_custom_call.1} parent=5 // pred_fallthru
        _
    $region6: #{tpu_custom_call.1} parent=1 // loop_footer
      %s20 = sadd.s32 1, %s16
    $region7: #{tpu_custom_call.1} parent=1 // loop_footer_branch
      %15 = sbr.rel target = $region3
    $region8: #{tpu_custom_call.1} parent=1 // loop_exit
      _
    %1722 = vsyncpa [#allocation4], 1
    %s1723 = scalar_lea.sflag [#allocation4], 1
    %1724 = vsyncpa %s1723, 1

</llo_original>
